<compile_context>
chip_gen: v6e
topology: v6e:2x2x1
jax: 0.10.0
libtpu: 0.0.40
codegen_flags: <defaults>
</compile_context>

<pallas_src>
import jax
import jax.numpy as jnp
from jax.experimental import pallas as pl
from jax.experimental.pallas import tpu as pltpu

LANE = 128


def _round_up(v, m):
    return (v + m - 1) // m * m


def _leaky_relu(v, slope=0.01):
    # nn.LeakyReLU default negative_slope = 0.01
    return jnp.where(v >= 0, v, slope * v)


def _hyper_set_encoder_kernel(x_ref, pool_ref,
                              w0, b0, w1, b1, w2, b2,
                              w3a, w3b, b3, w4, b4, w5, b5,
                              out_ref):
    """Full HyperSetEncoder2 forward (n_layer1=3, n_layer2=3) for bt sets.

    l=0: fc0 + lrelu
    l=1: fc1 + lrelu, residual add
    l=2: fc2 + lrelu, residual add, then per-set split mean-pool (one matmul)
    l=3: fc3 + lrelu on the pooled "concat" via split weights (no residual)
    l=4: fc4 + lrelu, residual add
    l=5: fc5 (no activation)
    """
    bt = out_ref.shape[0]

    # (bt*n, d) bf16 rows -- already flat, already matmul dtype.
    x = x_ref[...]

    def dense(v, w_ref, b_ref):
        # bf16 operands on the MXU, f32 accumulation, f32 bias add on the VPU.
        return (jnp.dot(v.astype(w_ref.dtype), w_ref[...],
                        preferred_element_type=jnp.float32)
                + b_ref[...])

    # layers 0-2 over all bt*n rows (residual AFTER activation, as in PyTorch)
    h = _leaky_relu(dense(x, w0, b0))
    h = _leaky_relu(dense(h, w1, b1)) + h
    h = _leaky_relu(dense(h, w2, b2)) + h                    # (bt*n, hpad) f32

    # fused per-set split mean-pool: one bf16 block-diagonal matmul.
    # pool rows [0, bt)    -> mean of first ks rows of each set (weight 1/ks)
    # pool rows [bt, 2*bt) -> mean of last n-ks rows of each set (1/(n-ks))
    pooled = jnp.dot(pool_ref[...], h.astype(pool_ref.dtype),
                     preferred_element_type=jnp.float32)     # (2*bt, hpad)
    p0 = pooled[:bt]          # bt is a multiple of 8 -> tile-aligned slice
    p1 = pooled[bt:]

    # layer 3 on the "concatenated" pooled features via split weights
    # (equivalent to concat([p0, p1], -1) @ W3, without any lane concat)
    z = _leaky_relu(
        jnp.dot(p0.astype(w3a.dtype), w3a[...],
                preferred_element_type=jnp.float32)
        + jnp.dot(p1.astype(w3b.dtype), w3b[...],
                  preferred_element_type=jnp.float32)
        + b3[...])
    z = _leaky_relu(dense(z, w4, b4)) + z
    z = dense(z, w5, b5)                                     # final linear

    out_ref[...] = z.astype(out_ref.dtype)                   # lane-dense store


def init_params(key, inp_dim, hidden_dim, out_dim,
                n_layer1=3, n_layer2=3, dtype=jnp.float32):
    """Deterministic synthetic init mirroring nn.Linear shapes.

    Weight l has shape (in_features_l, out_features_l); bias (1, out_features_l).
    """
    nl = n_layer1 + n_layer2
    num_dims_listo = [hidden_dim] * (nl - 1) + [out_dim]
    num_dims_listi = list(num_dims_listo)
    num_dims_listi[n_layer1 - 1] = hidden_dim * 2

    params = []
    for l in range(nl):
        in_f = inp_dim if l == 0 else num_dims_listi[l - 1]
        out_f = num_dims_listo[l]
        key, kw, kb = jax.random.split(key, 3)
        bound = 1.0 / float(in_f) ** 0.5
        w = jax.random.uniform(kw, (in_f, out_f), dtype, -bound, bound)
        b = jax.random.uniform(kb, (1, out_f), dtype, -bound, bound)
        params.append((w, b))
    return params


def _prepare_params(params, emb_dim, pos, g_layer, matmul_dtype):
    """Pad output lanes to 128, split W3, fold pos one-hot into b0, cast."""
    (w0, b0), (w1, b1), (w2, b2), (w3, b3), (w4, b4), (w5, b5) = params
    hidden = w0.shape[1]
    out_dim = w5.shape[1]

    if pos is not None:
        assert w0.shape[0] == emb_dim + g_layer
        # cat([x, onehot(pos)], -1) @ W0 == x @ W0[:emb_dim] + W0[emb_dim+pos].
        # Round-trip through matmul_dtype so the fold matches the bf16 weight
        # the matmul would otherwise see.
        b0 = b0 + w0[emb_dim + pos].astype(matmul_dtype).astype(w0.dtype)
        w0 = w0[:emb_dim]
    else:
        assert w0.shape[0] == emb_dim

    w3a, w3b = w3[:hidden], w3[hidden:]

    hpad = _round_up(hidden, LANE)
    opad = _round_up(out_dim, LANE)

    def pad_w(w, rows, cols):
        return jnp.pad(w, ((0, rows - w.shape[0]),
                           (0, cols - w.shape[1]))).astype(matmul_dtype)

    def pad_b(b, cols):
        b = b.reshape(1, -1)
        return jnp.pad(b, ((0, 0), (0, cols - b.shape[1]))).astype(jnp.float32)

    flat = [pad_w(w0, emb_dim, hpad), pad_b(b0, hpad),     # K=emb_dim, no K-pad
            pad_w(w1, hpad, hpad), pad_b(b1, hpad),
            pad_w(w2, hpad, hpad), pad_b(b2, hpad),
            pad_w(w3a, hpad, hpad), pad_w(w3b, hpad, hpad), pad_b(b3, hpad),
            pad_w(w4, hpad, hpad), pad_b(b4, hpad),
            pad_w(w5, hpad, opad), pad_b(b5, opad)]
    return flat, hpad, opad, out_dim


def _make_pool_matrix(bt, n, dtype):
    """Fused block-diagonal split-mean-pool matrix of shape (2*bt, bt*n)."""
    ks = n // 2
    rows = jnp.arange(2 * bt)
    cols = jnp.arange(bt * n)
    row_set = rows % bt                      # which set this output row pools
    is_second = (rows >= bt)[:, None]        # first-half or second-half pool
    same_set = (cols[None, :] // n) == row_set[:, None]
    in_first = (cols[None, :] % n < ks)
    pool0 = jnp.where(same_set & (~is_second) & in_first,
                      1.0 / ks, 0.0)
    pool1 = jnp.where(same_set & is_second & (~in_first),
                      1.0 / (n - ks), 0.0)
    return (pool0 + pool1).astype(dtype)


def hyper_set_encoder2_forward_batched(all_emb, params, pos=None, g_layer=5,
                                       block_b=128,
                                       matmul_dtype=jnp.bfloat16):
    """Batched forward: all_emb (B, n, d) -> (B, out_dim)."""
    B, n, d = all_emb.shape
    assert n >= 2, "need at least 2 rows per set for the split mean-pool"

    flat_params, hpad, opad, out_dim = _prepare_params(
        params, d, pos, g_layer, matmul_dtype)

    # sets per grid step; keep >= 2 grid steps when B allows it (v7x megacore).
    bt = _round_up(min(block_b, B), 8)
    if B > 8 and _round_up(B, bt) == bt:          # would be a single grid step
        bt = _round_up(pl.cdiv(B, 2), 8)
    Bp = _round_up(B, bt)

    # Flat bf16 input: no 128-lane padding, no f32 HBM copy.
    x = all_emb.astype(matmul_dtype).reshape(B * n, d)
    x = jnp.pad(x, ((0, (Bp - B) * n), (0, 0)))

    pool = _make_pool_matrix(bt, n, matmul_dtype)            # (2*bt, bt*n)

    grid = (Bp // bt,)
    in_specs = [pl.BlockSpec((bt * n, d), lambda i: (i, 0)),
                pl.BlockSpec(pool.shape, lambda i: (0, 0))]
    # weights / biases / pool: constant block index -> DMA'd once, resident.
    in_specs += [pl.BlockSpec(p.shape, lambda i: (0, 0)) for p in flat_params]
    out_spec = pl.BlockSpec((bt, opad), lambda i: (i, 0))

    out = pl.pallas_call(
        _hyper_set_encoder_kernel,
        out_shape=jax.ShapeDtypeStruct((Bp, opad), jnp.float32),
        grid=grid,
        in_specs=in_specs,
        out_specs=out_spec,
        compiler_params=pltpu.CompilerParams(
            dimension_semantics=("parallel",),
            vmem_limit_bytes=32 * 1024 * 1024),
    )(x, pool, *flat_params)
    return out[:B, :out_dim]


def hyper_set_encoder2_forward(all_emb, params, pos=None, g_layer=5,
                               matmul_dtype=jnp.bfloat16):
    """Single-set forward matching the PyTorch module: (n, d) -> (out_dim,)."""
    out = hyper_set_encoder2_forward_batched(all_emb[None], params, pos=pos,
                                             g_layer=g_layer, block_b=8,
                                             matmul_dtype=matmul_dtype)
    return out[0]


def _reference_forward(all_emb, params, pos=None, g_layer=5,
                       matmul_dtype=jnp.bfloat16):
    """Pure-JAX reference mirroring the kernel math (bf16 matmuls / pooling)."""
    x = all_emb.astype(jnp.float32)
    n = x.shape[0]
    if pos is not None:
        poso = jnp.zeros((n, g_layer), jnp.float32).at[:, pos].set(1.0)
        x = jnp.concatenate([x, poso], axis=-1)
    n_layer1, nl = 3, 6
    for l in range(nl):
        x0 = x
        w, b = params[l]
        x = (jnp.dot(x.astype(matmul_dtype), w.astype(matmul_dtype),
                     preferred_element_type=jnp.float32)
             + b.reshape(1, -1).astype(jnp.float32))
        if l < nl - 1:
            x = _leaky_relu(x)
        if l > 0 and l < nl - 1 and l != n_layer1:
            x = x + x0
        if l == n_layer1 - 1:
            ks = x.shape[0] // 2
            # kernel pools on bf16-cast activations (f32 accumulation)
            xb = x.astype(matmul_dtype).astype(jnp.float32)
            p0 = jnp.mean(xb[:ks], axis=0, keepdims=True)
            p1 = jnp.mean(xb[ks:], axis=0, keepdims=True)
            x = jnp.concatenate([p0, p1], axis=-1)
    return x[0]


if __name__ == "__main__":
    key = jax.random.PRNGKey(0)
    n, inp_dim, hidden_dim, out_dim, g_layer = 8, 16, 32, 8, 5
    B = 16

    k_x, k_p, k_pp, k_x2 = jax.random.split(key, 4)
    all_emb = jax.random.normal(k_x, (B, n, inp_dim), jnp.float32)
    params = init_params(k_p, inp_dim, hidden_dim, out_dim)
    ref = jnp.stack([_reference_forward(all_emb[b], params) for b in range(B)])

    # --- batched forward, default block_b (auto -> 2 grid steps x 8 sets) ---
    out = jax.block_until_ready(
        hyper_set_encoder2_forward_batched(all_emb, params))
    assert out.shape == (B, out_dim)
    assert jnp.allclose(out, ref, atol=1e-3, rtol=1e-3), (out, ref)

    # --- explicit small block_b (2 grid steps x 8 sets, no batch tail) ---
    out_s = jax.block_until_ready(
        hyper_set_encoder2_forward_batched(all_emb, params, block_b=8))
    assert jnp.allclose(out_s, ref, atol=1e-3, rtol=1e-3), (out_s, ref)

    # --- batch with a padded tail (B not a multiple of bt) ---
    B2 = 20
    all_emb2 = jax.random.normal(k_x2, (B2, n, inp_dim), jnp.float32)
    out2 = jax.block_until_ready(
        hyper_set_encoder2_forward_batched(all_emb2, params))
    ref2 = jnp.stack([_reference_forward(all_emb2[b], params)
                      for b in range(B2)])
    assert out2.shape == (B2, out_dim)
    assert jnp.allclose(out2, ref2, atol=1e-3, rtol=1e-3), (out2, ref2)

    # --- single-set forward (PyTorch module signature) ---
    out1 = jax.block_until_ready(hyper_set_encoder2_forward(all_emb[0], params))
    assert out1.shape == (out_dim,)
    assert jnp.allclose(out1, ref[0], atol=1e-3, rtol=1e-3), (out1, ref[0])

    # --- pos one-hot path (folded into fc0's bias) ---
    params_pos = init_params(k_pp, inp_dim + g_layer, hidden_dim, out_dim)
    out_p = jax.block_until_ready(
        hyper_set_encoder2_forward(all_emb[0], params_pos, pos=2,
                                   g_layer=g_layer))
    ref_p = _reference_forward(all_emb[0], params_pos, pos=2, g_layer=g_layer)
    assert jnp.allclose(out_p, ref_p, atol=1e-3, rtol=1e-3), (out_p, ref_p)

    print("KERNEL_OK")
</pallas_src>

<mosaic_0001>
module attributes {stable_mosaic.version = 11 : i64} {
  func.func @_hyper_set_encoder_kernel(%arg0: i32, %arg1: memref<64x16xbf16, #tpu.memory_space<vmem>>, %arg2: memref<16x64xbf16, #tpu.memory_space<vmem>>, %arg3: memref<16x128xbf16, #tpu.memory_space<vmem>>, %arg4: memref<1x128xf32, #tpu.memory_space<vmem>>, %arg5: memref<128x128xbf16, #tpu.memory_space<vmem>>, %arg6: memref<1x128xf32, #tpu.memory_space<vmem>>, %arg7: memref<128x128xbf16, #tpu.memory_space<vmem>>, %arg8: memref<1x128xf32, #tpu.memory_space<vmem>>, %arg9: memref<128x128xbf16, #tpu.memory_space<vmem>>, %arg10: memref<128x128xbf16, #tpu.memory_space<vmem>>, %arg11: memref<1x128xf32, #tpu.memory_space<vmem>>, %arg12: memref<128x128xbf16, #tpu.memory_space<vmem>>, %arg13: memref<1x128xf32, #tpu.memory_space<vmem>>, %arg14: memref<128x128xbf16, #tpu.memory_space<vmem>>, %arg15: memref<1x128xf32, #tpu.memory_space<vmem>>, %arg16: memref<8x128xf32, #tpu.memory_space<vmem>>) attributes {dimension_semantics = [#tpu.dimension_semantics<parallel>], iteration_bounds = array<i64: 2>, scalar_prefetch = 0 : i64, scratch_operands = 0 : i64, tpu.core_type = #tpu.core_type<tc>, window_params = [{transform_indices = @transform_0, window_bounds = array<i64: 64, 16>}, {pipeline_mode = #tpu.pipeline_mode<synchronous>, transform_indices = @transform_1, window_bounds = array<i64: 16, 64>}, {pipeline_mode = #tpu.pipeline_mode<synchronous>, transform_indices = @transform_2, window_bounds = array<i64: 16, 128>}, {pipeline_mode = #tpu.pipeline_mode<synchronous>, transform_indices = @transform_3, window_bounds = array<i64: 1, 128>}, {pipeline_mode = #tpu.pipeline_mode<synchronous>, transform_indices = @transform_4, window_bounds = array<i64: 128, 128>}, {pipeline_mode = #tpu.pipeline_mode<synchronous>, transform_indices = @transform_5, window_bounds = array<i64: 1, 128>}, {pipeline_mode = #tpu.pipeline_mode<synchronous>, transform_indices = @transform_6, window_bounds = array<i64: 128, 128>}, {pipeline_mode = #tpu.pipeline_mode<synchronous>, transform_indices = @transform_7, window_bounds = array<i64: 1, 128>}, {pipeline_mode = #tpu.pipeline_mode<synchronous>, transform_indices = @transform_8, window_bounds = array<i64: 128, 128>}, {pipeline_mode = #tpu.pipeline_mode<synchronous>, transform_indices = @transform_9, window_bounds = array<i64: 128, 128>}, {pipeline_mode = #tpu.pipeline_mode<synchronous>, transform_indices = @transform_10, window_bounds = array<i64: 1, 128>}, {pipeline_mode = #tpu.pipeline_mode<synchronous>, transform_indices = @transform_11, window_bounds = array<i64: 128, 128>}, {pipeline_mode = #tpu.pipeline_mode<synchronous>, transform_indices = @transform_12, window_bounds = array<i64: 1, 128>}, {pipeline_mode = #tpu.pipeline_mode<synchronous>, transform_indices = @transform_13, window_bounds = array<i64: 128, 128>}, {pipeline_mode = #tpu.pipeline_mode<synchronous>, transform_indices = @transform_14, window_bounds = array<i64: 1, 128>}, {transform_indices = @transform_15, window_bounds = array<i64: 8, 128>}]} {
    %c0 = arith.constant 0 : index
    %c0_0 = arith.constant 0 : index
    %0 = vector.load %arg1[%c0, %c0_0] : memref<64x16xbf16, #tpu.memory_space<vmem>>, vector<64x16xbf16>
    %c0_1 = arith.constant 0 : index
    %c0_2 = arith.constant 0 : index
    %1 = vector.load %arg3[%c0_1, %c0_2] : memref<16x128xbf16, #tpu.memory_space<vmem>>, vector<16x128xbf16>
    %cst = arith.constant dense<0.000000e+00> : vector<64x128xf32>
    %2 = tpu.matmul %0, %1, %cst {dimension_numbers = #tpu.dot_dimension_numbers<[1], [0], [0], [1], [0, 0, 1, 1], [], []>} : vector<64x16xbf16>, vector<16x128xbf16>, vector<64x128xf32> -> vector<64x128xf32>
    %c0_3 = arith.constant 0 : index
    %c0_4 = arith.constant 0 : index
    %3 = vector.load %arg4[%c0_3, %c0_4] : memref<1x128xf32, #tpu.memory_space<vmem>>, vector<1x128xf32>
    %4 = vector.broadcast %3 : vector<1x128xf32> to vector<64x128xf32>
    %5 = arith.addf %2, %4 : vector<64x128xf32>
    %cst_5 = arith.constant 0.000000e+00 : f32
    %6 = vector.broadcast %cst_5 : f32 to vector<64x128xf32>
    %7 = arith.cmpf oge, %5, %6 : vector<64x128xf32>
    %cst_6 = arith.constant 0.00999999977 : f32
    %8 = vector.broadcast %cst_6 : f32 to vector<64x128xf32>
    %9 = arith.mulf %8, %5 : vector<64x128xf32>
    %10 = arith.select %7, %5, %9 : vector<64x128xi1>, vector<64x128xf32>
    %11 = arith.truncf %10 : vector<64x128xf32> to vector<64x128xbf16>
    %c0_7 = arith.constant 0 : index
    %c0_8 = arith.constant 0 : index
    %12 = vector.load %arg5[%c0_7, %c0_8] : memref<128x128xbf16, #tpu.memory_space<vmem>>, vector<128x128xbf16>
    %cst_9 = arith.constant dense<0.000000e+00> : vector<64x128xf32>
    %13 = tpu.matmul %11, %12, %cst_9 {dimension_numbers = #tpu.dot_dimension_numbers<[1], [0], [0], [1], [0, 0, 1, 1], [], []>} : vector<64x128xbf16>, vector<128x128xbf16>, vector<64x128xf32> -> vector<64x128xf32>
    %c0_10 = arith.constant 0 : index
    %c0_11 = arith.constant 0 : index
    %14 = vector.load %arg6[%c0_10, %c0_11] : memref<1x128xf32, #tpu.memory_space<vmem>>, vector<1x128xf32>
    %15 = vector.broadcast %14 : vector<1x128xf32> to vector<64x128xf32>
    %16 = arith.addf %13, %15 : vector<64x128xf32>
    %cst_12 = arith.constant 0.000000e+00 : f32
    %17 = vector.broadcast %cst_12 : f32 to vector<64x128xf32>
    %18 = arith.cmpf oge, %16, %17 : vector<64x128xf32>
    %cst_13 = arith.constant 0.00999999977 : f32
    %19 = vector.broadcast %cst_13 : f32 to vector<64x128xf32>
    %20 = arith.mulf %19, %16 : vector<64x128xf32>
    %21 = arith.select %18, %16, %20 : vector<64x128xi1>, vector<64x128xf32>
    %22 = arith.addf %21, %10 : vector<64x128xf32>
    %23 = arith.truncf %22 : vector<64x128xf32> to vector<64x128xbf16>
    %c0_14 = arith.constant 0 : index
    %c0_15 = arith.constant 0 : index
    %24 = vector.load %arg7[%c0_14, %c0_15] : memref<128x128xbf16, #tpu.memory_space<vmem>>, vector<128x128xbf16>
    %cst_16 = arith.constant dense<0.000000e+00> : vector<64x128xf32>
    %25 = tpu.matmul %23, %24, %cst_16 {dimension_numbers = #tpu.dot_dimension_numbers<[1], [0], [0], [1], [0, 0, 1, 1], [], []>} : vector<64x128xbf16>, vector<128x128xbf16>, vector<64x128xf32> -> vector<64x128xf32>
    %c0_17 = arith.constant 0 : index
    %c0_18 = arith.constant 0 : index
    %26 = vector.load %arg8[%c0_17, %c0_18] : memref<1x128xf32, #tpu.memory_space<vmem>>, vector<1x128xf32>
    %27 = vector.broadcast %26 : vector<1x128xf32> to vector<64x128xf32>
    %28 = arith.addf %25, %27 : vector<64x128xf32>
    %cst_19 = arith.constant 0.000000e+00 : f32
    %29 = vector.broadcast %cst_19 : f32 to vector<64x128xf32>
    %30 = arith.cmpf oge, %28, %29 : vector<64x128xf32>
    %cst_20 = arith.constant 0.00999999977 : f32
    %31 = vector.broadcast %cst_20 : f32 to vector<64x128xf32>
    %32 = arith.mulf %31, %28 : vector<64x128xf32>
    %33 = arith.select %30, %28, %32 : vector<64x128xi1>, vector<64x128xf32>
    %34 = arith.addf %33, %22 : vector<64x128xf32>
    %c0_21 = arith.constant 0 : index
    %c0_22 = arith.constant 0 : index
    %35 = vector.load %arg2[%c0_21, %c0_22] : memref<16x64xbf16, #tpu.memory_space<vmem>>, vector<16x64xbf16>
    %36 = arith.truncf %34 : vector<64x128xf32> to vector<64x128xbf16>
    %cst_23 = arith.constant dense<0.000000e+00> : vector<16x128xf32>
    %37 = tpu.matmul %35, %36, %cst_23 {dimension_numbers = #tpu.dot_dimension_numbers<[1], [0], [0], [1], [0, 0, 1, 1], [], []>} : vector<16x64xbf16>, vector<64x128xbf16>, vector<16x128xf32> -> vector<16x128xf32>
    %38 = vector.extract_strided_slice %37 {offsets = [0, 0], sizes = [8, 128], strides = [1, 1]} : vector<16x128xf32> to vector<8x128xf32>
    %39 = vector.extract_strided_slice %37 {offsets = [8, 0], sizes = [8, 128], strides = [1, 1]} : vector<16x128xf32> to vector<8x128xf32>
    %40 = arith.truncf %38 : vector<8x128xf32> to vector<8x128xbf16>
    %c0_24 = arith.constant 0 : index
    %c0_25 = arith.constant 0 : index
    %41 = vector.load %arg9[%c0_24, %c0_25] : memref<128x128xbf16, #tpu.memory_space<vmem>>, vector<128x128xbf16>
    %cst_26 = arith.constant dense<0.000000e+00> : vector<8x128xf32>
    %42 = tpu.matmul %40, %41, %cst_26 {dimension_numbers = #tpu.dot_dimension_numbers<[1], [0], [0], [1], [0, 0, 1, 1], [], []>} : vector<8x128xbf16>, vector<128x128xbf16>, vector<8x128xf32> -> vector<8x128xf32>
    %43 = arith.truncf %39 : vector<8x128xf32> to vector<8x128xbf16>
    %c0_27 = arith.constant 0 : index
    %c0_28 = arith.constant 0 : index
    %44 = vector.load %arg10[%c0_27, %c0_28] : memref<128x128xbf16, #tpu.memory_space<vmem>>, vector<128x128xbf16>
    %cst_29 = arith.constant dense<0.000000e+00> : vector<8x128xf32>
    %45 = tpu.matmul %43, %44, %cst_29 {dimension_numbers = #tpu.dot_dimension_numbers<[1], [0], [0], [1], [0, 0, 1, 1], [], []>} : vector<8x128xbf16>, vector<128x128xbf16>, vector<8x128xf32> -> vector<8x128xf32>
    %46 = arith.addf %42, %45 : vector<8x128xf32>
    %c0_30 = arith.constant 0 : index
    %c0_31 = arith.constant 0 : index
    %47 = vector.load %arg11[%c0_30, %c0_31] : memref<1x128xf32, #tpu.memory_space<vmem>>, vector<1x128xf32>
    %48 = vector.broadcast %47 : vector<1x128xf32> to vector<8x128xf32>
    %49 = arith.addf %46, %48 : vector<8x128xf32>
    %cst_32 = arith.constant 0.000000e+00 : f32
    %50 = vector.broadcast %cst_32 : f32 to vector<8x128xf32>
    %51 = arith.cmpf oge, %49, %50 : vector<8x128xf32>
    %cst_33 = arith.constant 0.00999999977 : f32
    %52 = vector.broadcast %cst_33 : f32 to vector<8x128xf32>
    %53 = arith.mulf %52, %49 : vector<8x128xf32>
    %54 = arith.select %51, %49, %53 : vector<8x128xi1>, vector<8x128xf32>
    %55 = arith.truncf %54 : vector<8x128xf32> to vector<8x128xbf16>
    %c0_34 = arith.constant 0 : index
    %c0_35 = arith.constant 0 : index
    %56 = vector.load %arg12[%c0_34, %c0_35] : memref<128x128xbf16, #tpu.memory_space<vmem>>, vector<128x128xbf16>
    %cst_36 = arith.constant dense<0.000000e+00> : vector<8x128xf32>
    %57 = tpu.matmul %55, %56, %cst_36 {dimension_numbers = #tpu.dot_dimension_numbers<[1], [0], [0], [1], [0, 0, 1, 1], [], []>} : vector<8x128xbf16>, vector<128x128xbf16>, vector<8x128xf32> -> vector<8x128xf32>
    %c0_37 = arith.constant 0 : index
    %c0_38 = arith.constant 0 : index
    %58 = vector.load %arg13[%c0_37, %c0_38] : memref<1x128xf32, #tpu.memory_space<vmem>>, vector<1x128xf32>
    %59 = vector.broadcast %58 : vector<1x128xf32> to vector<8x128xf32>
    %60 = arith.addf %57, %59 : vector<8x128xf32>
    %cst_39 = arith.constant 0.000000e+00 : f32
    %61 = vector.broadcast %cst_39 : f32 to vector<8x128xf32>
    %62 = arith.cmpf oge, %60, %61 : vector<8x128xf32>
    %cst_40 = arith.constant 0.00999999977 : f32
    %63 = vector.broadcast %cst_40 : f32 to vector<8x128xf32>
    %64 = arith.mulf %63, %60 : vector<8x128xf32>
    %65 = arith.select %62, %60, %64 : vector<8x128xi1>, vector<8x128xf32>
    %66 = arith.addf %65, %54 : vector<8x128xf32>
    %67 = arith.truncf %66 : vector<8x128xf32> to vector<8x128xbf16>
    %c0_41 = arith.constant 0 : index
    %c0_42 = arith.constant 0 : index
    %68 = vector.load %arg14[%c0_41, %c0_42] : memref<128x128xbf16, #tpu.memory_space<vmem>>, vector<128x128xbf16>
    %cst_43 = arith.constant dense<0.000000e+00> : vector<8x128xf32>
    %69 = tpu.matmul %67, %68, %cst_43 {dimension_numbers = #tpu.dot_dimension_numbers<[1], [0], [0], [1], [0, 0, 1, 1], [], []>} : vector<8x128xbf16>, vector<128x128xbf16>, vector<8x128xf32> -> vector<8x128xf32>
    %c0_44 = arith.constant 0 : index
    %c0_45 = arith.constant 0 : index
    %70 = vector.load %arg15[%c0_44, %c0_45] : memref<1x128xf32, #tpu.memory_space<vmem>>, vector<1x128xf32>
    %71 = vector.broadcast %70 : vector<1x128xf32> to vector<8x128xf32>
    %72 = arith.addf %69, %71 : vector<8x128xf32>
    %c0_46 = arith.constant 0 : index
    %c0_47 = arith.constant 0 : index
    %73 = vector.load %arg16[%c0_46, %c0_47] : memref<8x128xf32, #tpu.memory_space<vmem>>, vector<8x128xf32>
    tpu.vector_store %arg16[%c0_46, %c0_47], %72 {strides = array<i32>} : memref<8x128xf32, #tpu.memory_space<vmem>>, vector<8x128xf32>,
    return
  }
  func.func @transform_0(%arg0: i32) -> (i32, i32) {
    %c0_i32 = arith.constant 0 : i32
    %c0_i32_0 = arith.constant 0 : i32
    return %arg0, %c0_i32 : i32, i32
  }
  func.func @transform_1(%arg0: i32) -> (i32, i32) {
    %c0_i32 = arith.constant 0 : i32
    %c0_i32_0 = arith.constant 0 : i32
    %c0_i32_1 = arith.constant 0 : i32
    return %c0_i32, %c0_i32_0 : i32, i32
  }
  func.func @transform_2(%arg0: i32) -> (i32, i32) {
    %c0_i32 = arith.constant 0 : i32
    %c0_i32_0 = arith.constant 0 : i32
    %c0_i32_1 = arith.constant 0 : i32
    return %c0_i32, %c0_i32_0 : i32, i32
  }
  func.func @transform_3(%arg0: i32) -> (i32, i32) {
    %c0_i32 = arith.constant 0 : i32
    %c0_i32_0 = arith.constant 0 : i32
    %c0_i32_1 = arith.constant 0 : i32
    return %c0_i32, %c0_i32_0 : i32, i32
  }
  func.func @transform_4(%arg0: i32) -> (i32, i32) {
    %c0_i32 = arith.constant 0 : i32
    %c0_i32_0 = arith.constant 0 : i32
    %c0_i32_1 = arith.constant 0 : i32
    return %c0_i32, %c0_i32_0 : i32, i32
  }
  func.func @transform_5(%arg0: i32) -> (i32, i32) {
    %c0_i32 = arith.constant 0 : i32
    %c0_i32_0 = arith.constant 0 : i32
    %c0_i32_1 = arith.constant 0 : i32
    return %c0_i32, %c0_i32_0 : i32, i32
  }
  func.func @transform_6(%arg0: i32) -> (i32, i32) {
    %c0_i32 = arith.constant 0 : i32
    %c0_i32_0 = arith.constant 0 : i32
    %c0_i32_1 = arith.constant 0 : i32
    return %c0_i32, %c0_i32_0 : i32, i32
  }
  func.func @transform_7(%arg0: i32) -> (i32, i32) {
    %c0_i32 = arith.constant 0 : i32
    %c0_i32_0 = arith.constant 0 : i32
    %c0_i32_1 = arith.constant 0 : i32
    return %c0_i32, %c0_i32_0 : i32, i32
  }
  func.func @transform_8(%arg0: i32) -> (i32, i32) {
    %c0_i32 = arith.constant 0 : i32
    %c0_i32_0 = arith.constant 0 : i32
    %c0_i32_1 = arith.constant 0 : i32
    return %c0_i32, %c0_i32_0 : i32, i32
  }
  func.func @transform_9(%arg0: i32) -> (i32, i32) {
    %c0_i32 = arith.constant 0 : i32
    %c0_i32_0 = arith.constant 0 : i32
    %c0_i32_1 = arith.constant 0 : i32
    return %c0_i32, %c0_i32_0 : i32, i32
  }
  func.func @transform_10(%arg0: i32) -> (i32, i32) {
    %c0_i32 = arith.constant 0 : i32
    %c0_i32_0 = arith.constant 0 : i32
    %c0_i32_1 = arith.constant 0 : i32
    return %c0_i32, %c0_i32_0 : i32, i32
  }
  func.func @transform_11(%arg0: i32) -> (i32, i32) {
    %c0_i32 = arith.constant 0 : i32
    %c0_i32_0 = arith.constant 0 : i32
    %c0_i32_1 = arith.constant 0 : i32
    return %c0_i32, %c0_i32_0 : i32, i32
  }
  func.func @transform_12(%arg0: i32) -> (i32, i32) {
    %c0_i32 = arith.constant 0 : i32
    %c0_i32_0 = arith.constant 0 : i32
    %c0_i32_1 = arith.constant 0 : i32
    return %c0_i32, %c0_i32_0 : i32, i32
  }
  func.func @transform_13(%arg0: i32) -> (i32, i32) {
    %c0_i32 = arith.constant 0 : i32
    %c0_i32_0 = arith.constant 0 : i32
    %c0_i32_1 = arith.constant 0 : i32
    return %c0_i32, %c0_i32_0 : i32, i32
  }
  func.func @transform_14(%arg0: i32) -> (i32, i32) {
    %c0_i32 = arith.constant 0 : i32
    %c0_i32_0 = arith.constant 0 : i32
    %c0_i32_1 = arith.constant 0 : i32
    return %c0_i32, %c0_i32_0 : i32, i32
  }
  func.func @transform_15(%arg0: i32) -> (i32, i32) {
    %c0_i32 = arith.constant 0 : i32
    %c0_i32_0 = arith.constant 0 : i32
    return %arg0, %c0_i32 : i32, i32
  }
}

</mosaic_0001>

<llo_original>
// kernel: tpu_custom_call.1
$region0: #{tpu_custom_call.1}
  #allocation0 [shape = 'u32[]', space=smem, size = 0x4, offset = 0x4, fixed_abs, tag = 'smem constant byte address 0x4 - core index']
  #allocation1 [shape = 'u32[144,128]{1,0:T(1,128)}', space=vmem, size = 0x12000, scoped, tag = 'internal scratch']
  %s0 = inlined_call_operand.vmem [shape: bf16[128,16], index: 0, kind: input, shape index: {}]
  %s1 = inlined_call_operand.vmem [shape: bf16[16,64], index: 1, kind: input, shape index: {}]
  %s2 = inlined_call_operand.hbm [shape: bf16[16,128], index: 2, kind: input, shape index: {}]
  %s3 = inlined_call_operand.vmem [shape: f32[1,128], index: 3, kind: input, shape index: {}]
  %s4 = inlined_call_operand.vmem [shape: bf16[128,128], index: 4, kind: input, shape index: {}]
  %s5 = inlined_call_operand.vmem [shape: f32[1,128], index: 5, kind: input, shape index: {}]
  %s6 = inlined_call_operand.hbm [shape: bf16[128,128], index: 6, kind: input, shape index: {}]
  %s7 = inlined_call_operand.vmem [shape: f32[1,128], index: 7, kind: input, shape index: {}]
  %s8 = inlined_call_operand.hbm [shape: bf16[128,128], index: 8, kind: input, shape index: {}]
  %s9 = inlined_call_operand.hbm [shape: bf16[128,128], index: 9, kind: input, shape index: {}]
  %s10 = inlined_call_operand.vmem [shape: f32[1,128], index: 10, kind: input, shape index: {}]
  %s11 = inlined_call_operand.hbm [shape: bf16[128,128], index: 11, kind: input, shape index: {}]
  %s12 = inlined_call_operand.vmem [shape: f32[1,128], index: 12, kind: input, shape index: {}]
  %s13 = inlined_call_operand.hbm [shape: bf16[128,128], index: 13, kind: input, shape index: {}]
  %s14 = inlined_call_operand.vmem [shape: f32[1,128], index: 14, kind: input, shape index: {}]
  %s15 = inlined_call_operand.hbm [shape: f32[16,128], index: 15, kind: output, shape index: {}]
  %s16 = sld [smem:[#allocation0]]
  $region117: #{tpu_custom_call.1} parent=0
    _
  %s18 = ssub.s32 1, %s16
  %s19 = scalar_select 0, %s18, %s16
  $region1: #{tpu_custom_call.1} parent=0
    #allocation2 [shape = 'u8[4096]{0}', space=vmem, size = 0x1000, scoped, tag = 'input window, operand 2, single buffered']
    #allocation3 [shape = 's32[2]{0}', space=sflag, size = 0x8, scoped, tag = 'scoped memory for tpu_custom_call.1']
    #allocation4 [shape = 's32[2]{0}', space=sflag, size = 0x8, scoped, tag = 'scoped memory for tpu_custom_call.1']
    #allocation5 [shape = 'u8[32768]{0}', space=vmem, size = 0x8000, scoped, tag = 'input window, operand 6, single buffered']
    #allocation6 [shape = 's32[1]{0}', space=sflag, size = 0x4, scoped, tag = 'scoped memory for tpu_custom_call.1']
    #allocation7 [shape = 'u8[32768]{0}', space=vmem, size = 0x8000, scoped, tag = 'input window, operand 8, single buffered']
    #allocation8 [shape = 'u8[32768]{0}', space=vmem, size = 0x8000, scoped, tag = 'input window, operand 9, single buffered']
    #allocation9 [shape = 's32[1]{0}', space=sflag, size = 0x4, scoped, tag = 'scoped memory for tpu_custom_call.1']
    #allocation10 [shape = 'u8[32768]{0}', space=vmem, size = 0x8000, scoped, tag = 'input window, operand 11, single buffered']
    #allocation11 [shape = 'u8[32768]{0}', space=vmem, size = 0x8000, scoped, tag = 'input window, operand 13, single buffered']
    #allocation12 [shape = 's32[1]{0}', space=sflag, size = 0x4, scoped, tag = 'scoped memory for tpu_custom_call.1']
    #allocation13 [shape = 'u8[8192]{0}', space=vmem, size = 0x2000, scoped, tag = 'output window, operand 0']
    %20 = vsyncpa [#allocation3], 0
    %21 = vsyncpa [#allocation6], 0
    %22 = vsyncpa [#allocation9], 0
    %23 = vsyncpa [#allocation12], 0
    %24 = vsyncpa [#allocation4], 0
    %s25 = scalar_lea.sflag [#allocation4], 1
    %26 = vsyncpa %s25, 0
    loop: start=0, step=1, limit=4
    $region2: #{tpu_custom_call.1} parent=1 // loop_pre_header
      _
    $region3: #{tpu_custom_call.1} parent=1 // loop_header
      %s28 = sphi 0, %s32
      %p29 = scmp.ge.s32.totalorder %s28, 4
      %s38 = sphi 0, %s40
      %s41 = sphi 0, %s38
      %s42 = sphi 0, %s41
      %s58 = sphi 0, %s42
      %s62 = sphi 0, %s62
      %s64 = sphi 0, %s62
      %s65 = sphi 0, %s64
      %s79 = sphi 0, %s65
      %s83 = sphi 0, %s83
      %s85 = sphi 0, %s83
      %s86 = sphi 0, %s85
      %s100 = sphi 0, %s86
      %s104 = sphi 0, %s104
      %s106 = sphi 0, %s104
      %s107 = sphi 0, %s106
      %s121 = sphi 0, %s107
      %s125 = sphi 0, %s125
      %s127 = sphi 0, %s125
      %s128 = sphi 0, %s127
      %s142 = sphi 0, %s128
      %s146 = sphi 0, %s146
      %s148 = sphi 0, %s146
      %s149 = sphi 0, %s148
      %s163 = sphi 0, %s149
      %s167 = sphi 0, %s167
      %s169 = sphi 0, %s167
      %s170 = sphi 0, %s169
      %s184 = sphi 0, %s170
      %s188 = sphi 0, %s188
      %s190 = sphi 0, %s188
      %s191 = sphi 0, %s190
      %s205 = sphi 0, %s191
      %s209 = sphi 0, %s209
      %s211 = sphi 0, %s209
      %s212 = sphi 0, %s211
      %s226 = sphi 0, %s212
      %s230 = sphi 0, %s230
      %s232 = sphi 0, %s230
      %s233 = sphi 0, %s232
      %s247 = sphi 0, %s233
      %s251 = sphi 0, %s251
      %s253 = sphi 0, %s251
      %s254 = sphi 0, %s253
      %s268 = sphi 0, %s254
      %s272 = sphi 0, %s272
      %s274 = sphi 0, %s272
      %s275 = sphi 0, %s274
      %s289 = sphi 0, %s275
      %s293 = sphi 0, %s293
      %s295 = sphi 0, %s293
      %s296 = sphi 0, %s295
      %s310 = sphi 0, %s296
      %s314 = sphi 0, %s314
      %s316 = sphi 0, %s314
      %s317 = sphi 0, %s316
      %s331 = sphi 0, %s317
      %s335 = sphi 0, %s335
      %s337 = sphi 0, %s335
      %s338 = sphi 0, %s337
      %s352 = sphi 0, %s338
      %s358 = sphi 0, %s360
      %s361 = sphi 0, %s358
      %s362 = sphi 0, %s361
      %s378 = sphi 0, %s362
    $region4: #{tpu_custom_call.1} parent=1 // loop_header_branch
      %31 = sbr.rel (%p29) target = $region8
    $region5: #{tpu_custom_call.1} parent=1 // loop_body
      %s33 = ssub.s32 %s28, 1
      %s34 = ssub.s32 %s28, 2
      %s35 = sadd.s32 %s28, 1
      %s36 = ssub.s32 %s28, %s35
      %p37 = scmp.eq.s32.totalorder %s36, 0
      %s39 = sadd.s32 %s38, 1
      %s40 = scalar_select %p37, %s38, %s39
      %p43 = pneg %p37
      %p44 = scmp.eq.s32.totalorder %s28, 1
      %p45 = por %p43, %p44
      %p46 = scmp.ne.s32.totalorder %s38, %s41
      %p47 = scmp.eq.s32.totalorder %s28, 0
      %p48 = por %p46, %p47
      %p49 = scmp.ne.s32.totalorder %s38, %s41
      %p50 = scmp.eq.s32.totalorder %s33, 1
      %p51 = por %p49, %p50
      %p52 = scmp.ne.s32.totalorder %s41, %s42
      %p53 = scmp.eq.s32.totalorder %s33, 0
      %p54 = por %p52, %p53
      %p55 = scmp.ne.s32.totalorder %s41, %s42
      %p56 = scmp.eq.s32.totalorder %s34, 1
      %p57 = por %p55, %p56
      %p59 = scmp.ne.s32.totalorder %s42, %s58
      %p60 = scmp.eq.s32.totalorder %s34, 0
      %p61 = por %p59, %p60
      %s63 = sadd.s32 %s62, 1
      %p66 = scmp.eq.s32.totalorder %s28, 1
      %p67 = scmp.ne.s32.totalorder %s62, %s64
      %p68 = scmp.eq.s32.totalorder %s28, 0
      %p69 = por %p67, %p68
      %p70 = scmp.ne.s32.totalorder %s62, %s64
      %p71 = scmp.eq.s32.totalorder %s33, 1
      %p72 = por %p70, %p71
      %p73 = scmp.ne.s32.totalorder %s64, %s65
      %p74 = scmp.eq.s32.totalorder %s33, 0
      %p75 = por %p73, %p74
      %p76 = scmp.ne.s32.totalorder %s64, %s65
      %p77 = scmp.eq.s32.totalorder %s34, 1
      %p78 = por %p76, %p77
      %p80 = scmp.ne.s32.totalorder %s65, %s79
      %p81 = scmp.eq.s32.totalorder %s34, 0
      %p82 = por %p80, %p81
      %s84 = sadd.s32 %s83, 1
      %p87 = scmp.eq.s32.totalorder %s28, 1
      %p88 = scmp.ne.s32.totalorder %s83, %s85
      %p89 = scmp.eq.s32.totalorder %s28, 0
      %p90 = por %p88, %p89
      %p91 = scmp.ne.s32.totalorder %s83, %s85
      %p92 = scmp.eq.s32.totalorder %s33, 1
      %p93 = por %p91, %p92
      %p94 = scmp.ne.s32.totalorder %s85, %s86
      %p95 = scmp.eq.s32.totalorder %s33, 0
      %p96 = por %p94, %p95
      %p97 = scmp.ne.s32.totalorder %s85, %s86
      %p98 = scmp.eq.s32.totalorder %s34, 1
      %p99 = por %p97, %p98
      %p101 = scmp.ne.s32.totalorder %s86, %s100
      %p102 = scmp.eq.s32.totalorder %s34, 0
      %p103 = por %p101, %p102
      %s105 = sadd.s32 %s104, 1
      %p108 = scmp.eq.s32.totalorder %s28, 1
      %p109 = scmp.ne.s32.totalorder %s104, %s106
      %p110 = scmp.eq.s32.totalorder %s28, 0
      %p111 = por %p109, %p110
      %p112 = scmp.ne.s32.totalorder %s104, %s106
      %p113 = scmp.eq.s32.totalorder %s33, 1
      %p114 = por %p112, %p113
      %p115 = scmp.ne.s32.totalorder %s106, %s107
      %p116 = scmp.eq.s32.totalorder %s33, 0
      %p117 = por %p115, %p116
      %p118 = scmp.ne.s32.totalorder %s106, %s107
      %p119 = scmp.eq.s32.totalorder %s34, 1
      %p120 = por %p118, %p119
      %p122 = scmp.ne.s32.totalorder %s107, %s121
      %p123 = scmp.eq.s32.totalorder %s34, 0
      %p124 = por %p122, %p123
      %s126 = sadd.s32 %s125, 1
      %p129 = scmp.eq.s32.totalorder %s28, 1
      %p130 = scmp.ne.s32.totalorder %s125, %s127
      %p131 = scmp.eq.s32.totalorder %s28, 0
      %p132 = por %p130, %p131
      %p133 = scmp.ne.s32.totalorder %s125, %s127
      %p134 = scmp.eq.s32.totalorder %s33, 1
      %p135 = por %p133, %p134
      %p136 = scmp.ne.s32.totalorder %s127, %s128
      %p137 = scmp.eq.s32.totalorder %s33, 0
      %p138 = por %p136, %p137
      %p139 = scmp.ne.s32.totalorder %s127, %s128
      %p140 = scmp.eq.s32.totalorder %s34, 1
      %p141 = por %p139, %p140
      %p143 = scmp.ne.s32.totalorder %s128, %s142
      %p144 = scmp.eq.s32.totalorder %s34, 0
      %p145 = por %p143, %p144
      %s147 = sadd.s32 %s146, 1
      %p150 = scmp.eq.s32.totalorder %s28, 1
      %p151 = scmp.ne.s32.totalorder %s146, %s148
      %p152 = scmp.eq.s32.totalorder %s28, 0
      %p153 = por %p151, %p152
      %p154 = scmp.ne.s32.totalorder %s146, %s148
      %p155 = scmp.eq.s32.totalorder %s33, 1
      %p156 = por %p154, %p155
      %p157 = scmp.ne.s32.totalorder %s148, %s149
      %p158 = scmp.eq.s32.totalorder %s33, 0
      %p159 = por %p157, %p158
      %p160 = scmp.ne.s32.totalorder %s148, %s149
      %p161 = scmp.eq.s32.totalorder %s34, 1
      %p162 = por %p160, %p161
      %p164 = scmp.ne.s32.totalorder %s149, %s163
      %p165 = scmp.eq.s32.totalorder %s34, 0
      %p166 = por %p164, %p165
      %s168 = sadd.s32 %s167, 1
      %p171 = scmp.eq.s32.totalorder %s28, 1
      %p172 = scmp.ne.s32.totalorder %s167, %s169
      %p173 = scmp.eq.s32.totalorder %s28, 0
      %p174 = por %p172, %p173
      %p175 = scmp.ne.s32.totalorder %s167, %s169
      %p176 = scmp.eq.s32.totalorder %s33, 1
      %p177 = por %p175, %p176
      %p178 = scmp.ne.s32.totalorder %s169, %s170
      %p179 = scmp.eq.s32.totalorder %s33, 0
      %p180 = por %p178, %p179
      %p181 = scmp.ne.s32.totalorder %s169, %s170
      %p182 = scmp.eq.s32.totalorder %s34, 1
      %p183 = por %p181, %p182
      %p185 = scmp.ne.s32.totalorder %s170, %s184
      %p186 = scmp.eq.s32.totalorder %s34, 0
      %p187 = por %p185, %p186
      %s189 = sadd.s32 %s188, 1
      %p192 = scmp.eq.s32.totalorder %s28, 1
      %p193 = scmp.ne.s32.totalorder %s188, %s190
      %p194 = scmp.eq.s32.totalorder %s28, 0
      %p195 = por %p193, %p194
      %p196 = scmp.ne.s32.totalorder %s188, %s190
      %p197 = scmp.eq.s32.totalorder %s33, 1
      %p198 = por %p196, %p197
      %p199 = scmp.ne.s32.totalorder %s190, %s191
      %p200 = scmp.eq.s32.totalorder %s33, 0
      %p201 = por %p199, %p200
      %p202 = scmp.ne.s32.totalorder %s190, %s191
      %p203 = scmp.eq.s32.totalorder %s34, 1
      %p204 = por %p202, %p203
      %p206 = scmp.ne.s32.totalorder %s191, %s205
      %p207 = scmp.eq.s32.totalorder %s34, 0
      %p208 = por %p206, %p207
      %s210 = sadd.s32 %s209, 1
      %p213 = scmp.eq.s32.totalorder %s28, 1
      %p214 = scmp.ne.s32.totalorder %s209, %s211
      %p215 = scmp.eq.s32.totalorder %s28, 0
      %p216 = por %p214, %p215
      %p217 = scmp.ne.s32.totalorder %s209, %s211
      %p218 = scmp.eq.s32.totalorder %s33, 1
      %p219 = por %p217, %p218
      %p220 = scmp.ne.s32.totalorder %s211, %s212
      %p221 = scmp.eq.s32.totalorder %s33, 0
      %p222 = por %p220, %p221
      %p223 = scmp.ne.s32.totalorder %s211, %s212
      %p224 = scmp.eq.s32.totalorder %s34, 1
      %p225 = por %p223, %p224
      %p227 = scmp.ne.s32.totalorder %s212, %s226
      %p228 = scmp.eq.s32.totalorder %s34, 0
      %p229 = por %p227, %p228
      %s231 = sadd.s32 %s230, 1
      %p234 = scmp.eq.s32.totalorder %s28, 1
      %p235 = scmp.ne.s32.totalorder %s230, %s232
      %p236 = scmp.eq.s32.totalorder %s28, 0
      %p237 = por %p235, %p236
      %p238 = scmp.ne.s32.totalorder %s230, %s232
      %p239 = scmp.eq.s32.totalorder %s33, 1
      %p240 = por %p238, %p239
      %p241 = scmp.ne.s32.totalorder %s232, %s233
      %p242 = scmp.eq.s32.totalorder %s33, 0
      %p243 = por %p241, %p242
      %p244 = scmp.ne.s32.totalorder %s232, %s233
      %p245 = scmp.eq.s32.totalorder %s34, 1
      %p246 = por %p244, %p245
      %p248 = scmp.ne.s32.totalorder %s233, %s247
      %p249 = scmp.eq.s32.totalorder %s34, 0
      %p250 = por %p248, %p249
      %s252 = sadd.s32 %s251, 1
      %p255 = scmp.eq.s32.totalorder %s28, 1
      %p256 = scmp.ne.s32.totalorder %s251, %s253
      %p257 = scmp.eq.s32.totalorder %s28, 0
      %p258 = por %p256, %p257
      %p259 = scmp.ne.s32.totalorder %s251, %s253
      %p260 = scmp.eq.s32.totalorder %s33, 1
      %p261 = por %p259, %p260
      %p262 = scmp.ne.s32.totalorder %s253, %s254
      %p263 = scmp.eq.s32.totalorder %s33, 0
      %p264 = por %p262, %p263
      %p265 = scmp.ne.s32.totalorder %s253, %s254
      %p266 = scmp.eq.s32.totalorder %s34, 1
      %p267 = por %p265, %p266
      %p269 = scmp.ne.s32.totalorder %s254, %s268
      %p270 = scmp.eq.s32.totalorder %s34, 0
      %p271 = por %p269, %p270
      %s273 = sadd.s32 %s272, 1
      %p276 = scmp.eq.s32.totalorder %s28, 1
      %p277 = scmp.ne.s32.totalorder %s272, %s274
      %p278 = scmp.eq.s32.totalorder %s28, 0
      %p279 = por %p277, %p278
      %p280 = scmp.ne.s32.totalorder %s272, %s274
      %p281 = scmp.eq.s32.totalorder %s33, 1
      %p282 = por %p280, %p281
      %p283 = scmp.ne.s32.totalorder %s274, %s275
      %p284 = scmp.eq.s32.totalorder %s33, 0
      %p285 = por %p283, %p284
      %p286 = scmp.ne.s32.totalorder %s274, %s275
      %p287 = scmp.eq.s32.totalorder %s34, 1
      %p288 = por %p286, %p287
      %p290 = scmp.ne.s32.totalorder %s275, %s289
      %p291 = scmp.eq.s32.totalorder %s34, 0
      %p292 = por %p290, %p291
      %s294 = sadd.s32 %s293, 1
      %p297 = scmp.eq.s32.totalorder %s28, 1
      %p298 = scmp.ne.s32.totalorder %s293, %s295
      %p299 = scmp.eq.s32.totalorder %s28, 0
      %p300 = por %p298, %p299
      %p301 = scmp.ne.s32.totalorder %s293, %s295
      %p302 = scmp.eq.s32.totalorder %s33, 1
      %p303 = por %p301, %p302
      %p304 = scmp.ne.s32.totalorder %s295, %s296
      %p305 = scmp.eq.s32.totalorder %s33, 0
      %p306 = por %p304, %p305
      %p307 = scmp.ne.s32.totalorder %s295, %s296
      %p308 = scmp.eq.s32.totalorder %s34, 1
      %p309 = por %p307, %p308
      %p311 = scmp.ne.s32.totalorder %s296, %s310
      %p312 = scmp.eq.s32.totalorder %s34, 0
      %p313 = por %p311, %p312
      %s315 = sadd.s32 %s314, 1
      %p318 = scmp.eq.s32.totalorder %s28, 1
      %p319 = scmp.ne.s32.totalorder %s314, %s316
      %p320 = scmp.eq.s32.totalorder %s28, 0
      %p321 = por %p319, %p320
      %p322 = scmp.ne.s32.totalorder %s314, %s316
      %p323 = scmp.eq.s32.totalorder %s33, 1
      %p324 = por %p322, %p323
      %p325 = scmp.ne.s32.totalorder %s316, %s317
      %p326 = scmp.eq.s32.totalorder %s33, 0
      %p327 = por %p325, %p326
      %p328 = scmp.ne.s32.totalorder %s316, %s317
      %p329 = scmp.eq.s32.totalorder %s34, 1
      %p330 = por %p328, %p329
      %p332 = scmp.ne.s32.totalorder %s317, %s331
      %p333 = scmp.eq.s32.totalorder %s34, 0
      %p334 = por %p332, %p333
      %s336 = sadd.s32 %s335, 1
      %p339 = scmp.eq.s32.totalorder %s28, 1
      %p340 = scmp.ne.s32.totalorder %s335, %s337
      %p341 = scmp.eq.s32.totalorder %s28, 0
      %p342 = por %p340, %p341
      %p343 = scmp.ne.s32.totalorder %s335, %s337
      %p344 = scmp.eq.s32.totalorder %s33, 1
      %p345 = por %p343, %p344
      %p346 = scmp.ne.s32.totalorder %s337, %s338
      %p347 = scmp.eq.s32.totalorder %s33, 0
      %p348 = por %p346, %p347
      %p349 = scmp.ne.s32.totalorder %s337, %s338
      %p350 = scmp.eq.s32.totalorder %s34, 1
      %p351 = por %p349, %p350
      %p353 = scmp.ne.s32.totalorder %s338, %s352
      %p354 = scmp.eq.s32.totalorder %s34, 0
      %p355 = por %p353, %p354
      %s356 = ssub.s32 %s28, %s35
      %p357 = scmp.eq.s32.totalorder %s356, 0
      %s359 = sadd.s32 %s358, 1
      %s360 = scalar_select %p357, %s358, %s359
      %p363 = pneg %p357
      %p364 = scmp.eq.s32.totalorder %s28, 1
      %p365 = por %p363, %p364
      %p366 = scmp.ne.s32.totalorder %s358, %s361
      %p367 = scmp.eq.s32.totalorder %s28, 0
      %p368 = por %p366, %p367
      %p369 = scmp.ne.s32.totalorder %s358, %s361
      %p370 = scmp.eq.s32.totalorder %s33, 1
      %p371 = por %p369, %p370
      %p372 = scmp.ne.s32.totalorder %s361, %s362
      %p373 = scmp.eq.s32.totalorder %s33, 0
      %p374 = por %p372, %p373
      %p375 = scmp.ne.s32.totalorder %s361, %s362
      %p376 = scmp.eq.s32.totalorder %s34, 1
      %p377 = por %p375, %p376
      %p379 = scmp.ne.s32.totalorder %s362, %s378
      %p380 = scmp.eq.s32.totalorder %s34, 0
      %p381 = por %p379, %p380
      %p382 = scmp.le.s32.totalorder 1, %s28
      %p383 = scmp.lt.s32.totalorder %s28, 3
      %p384 = pnand %p382, %p383
      %p385 = pneg %p384
      // Predicated region
      $region9: #{tpu_custom_call.1} parent=5 // pred_check
        _
      $region10: #{tpu_custom_call.1} parent=5 // pred_check_branch
        %387 = sbr.rel (%p384) target = $region12
      $region11: #{tpu_custom_call.1} parent=5 // pred_region
        %s388 = ssub.s32 %s28, 1
        // Predicated region
        $region13: #{tpu_custom_call.1} parent=11 // pred_check
          %p389 = pneg %p75
        $region14: #{tpu_custom_call.1} parent=11 // pred_check_branch
          %391 = sbr.rel (%p389) target = $region16
        $region15: #{tpu_custom_call.1} parent=11 // pred_region
          _
        $region16: #{tpu_custom_call.1} parent=11 // pred_fallthru
          _
        // Predicated region
        $region17: #{tpu_custom_call.1} parent=11 // pred_check
          %p392 = pneg %p96
        $region18: #{tpu_custom_call.1} parent=11 // pred_check_branch
          %394 = sbr.rel (%p392) target = $region20
        $region19: #{tpu_custom_call.1} parent=11 // pred_region
          %s396 = ssub.s32 128, 128
          %397 = vsyncadd [#allocation3], %s396
          %s398 = sshll.u32 [#allocation2], 4
          %s399 = int_to_ptr.vmem [resolvable:$true] %s398
          %404 = dma.hbm_to_vmem [thread:$0]  %s2, 128, %s399, [#allocation3], 64, 64, 4
        $region20: #{tpu_custom_call.1} parent=11 // pred_fallthru
          _
        // Predicated region
        $region21: #{tpu_custom_call.1} parent=11 // pred_check
          %p405 = pneg %p117
        $region22: #{tpu_custom_call.1} parent=11 // pred_check_branch
          %407 = sbr.rel (%p405) target = $region24
        $region23: #{tpu_custom_call.1} parent=11 // pred_region
          _
        $region24: #{tpu_custom_call.1} parent=11 // pred_fallthru
          _
        // Predicated region
        $region25: #{tpu_custom_call.1} parent=11 // pred_check
          %p408 = pneg %p138
        $region26: #{tpu_custom_call.1} parent=11 // pred_check_branch
          %410 = sbr.rel (%p408) target = $region28
        $region27: #{tpu_custom_call.1} parent=11 // pred_region
          _
        $region28: #{tpu_custom_call.1} parent=11 // pred_fallthru
          _
        // Predicated region
        $region29: #{tpu_custom_call.1} parent=11 // pred_check
          %p411 = pneg %p159
        $region30: #{tpu_custom_call.1} parent=11 // pred_check_branch
          %413 = sbr.rel (%p411) target = $region32
        $region31: #{tpu_custom_call.1} parent=11 // pred_region
          _
        $region32: #{tpu_custom_call.1} parent=11 // pred_fallthru
          _
        // Predicated region
        $region33: #{tpu_custom_call.1} parent=11 // pred_check
          %p414 = pneg %p180
        $region34: #{tpu_custom_call.1} parent=11 // pred_check_branch
          %416 = sbr.rel (%p414) target = $region36
        $region35: #{tpu_custom_call.1} parent=11 // pred_region
          %s418 = ssub.s32 1024, 1024
          %419 = vsyncadd [#allocation6], %s418
          %s420 = sshll.u32 [#allocation5], 4
          %s421 = int_to_ptr.vmem [resolvable:$true] %s420
          %426 = dma.hbm_to_vmem [thread:$0]  %s6, 1024, %s421, [#allocation6], 64, 64, 4
        $region36: #{tpu_custom_call.1} parent=11 // pred_fallthru
          _
        // Predicated region
        $region37: #{tpu_custom_call.1} parent=11 // pred_check
          %p427 = pneg %p201
        $region38: #{tpu_custom_call.1} parent=11 // pred_check_branch
          %429 = sbr.rel (%p427) target = $region40
        $region39: #{tpu_custom_call.1} parent=11 // pred_region
          _
        $region40: #{tpu_custom_call.1} parent=11 // pred_fallthru
          _
        // Predicated region
        $region41: #{tpu_custom_call.1} parent=11 // pred_check
          %p430 = pneg %p222
        $region42: #{tpu_custom_call.1} parent=11 // pred_check_branch
          %432 = sbr.rel (%p430) target = $region44
        $region43: #{tpu_custom_call.1} parent=11 // pred_region
          %s434 = ssub.s32 1024, 1024
          %435 = vsyncadd [#allocation6], %s434
          %s436 = sshll.u32 [#allocation7], 4
          %s437 = int_to_ptr.vmem [resolvable:$true] %s436
          %442 = dma.hbm_to_vmem [thread:$0]  %s8, 1024, %s437, [#allocation6], 64, 64, 4
        $region44: #{tpu_custom_call.1} parent=11 // pred_fallthru
          _
        // Predicated region
        $region45: #{tpu_custom_call.1} parent=11 // pred_check
          %p443 = pneg %p243
        $region46: #{tpu_custom_call.1} parent=11 // pred_check_branch
          %445 = sbr.rel (%p443) target = $region48
        $region47: #{tpu_custom_call.1} parent=11 // pred_region
          %s447 = ssub.s32 1024, 1024
          %448 = vsyncadd [#allocation9], %s447
          %s449 = sshll.u32 [#allocation8], 4
          %s450 = int_to_ptr.vmem [resolvable:$true] %s449
          %455 = dma.hbm_to_vmem [thread:$0]  %s9, 1024, %s450, [#allocation9], 64, 64, 4
        $region48: #{tpu_custom_call.1} parent=11 // pred_fallthru
          _
        // Predicated region
        $region49: #{tpu_custom_call.1} parent=11 // pred_check
          %p456 = pneg %p264
        $region50: #{tpu_custom_call.1} parent=11 // pred_check_branch
          %458 = sbr.rel (%p456) target = $region52
        $region51: #{tpu_custom_call.1} parent=11 // pred_region
          _
        $region52: #{tpu_custom_call.1} parent=11 // pred_fallthru
          _
        // Predicated region
        $region53: #{tpu_custom_call.1} parent=11 // pred_check
          %p459 = pneg %p285
        $region54: #{tpu_custom_call.1} parent=11 // pred_check_branch
          %461 = sbr.rel (%p459) target = $region56
        $region55: #{tpu_custom_call.1} parent=11 // pred_region
          %s463 = ssub.s32 1024, 1024
          %464 = vsyncadd [#allocation9], %s463
          %s465 = sshll.u32 [#allocation10], 4
          %s466 = int_to_ptr.vmem [resolvable:$true] %s465
          %471 = dma.hbm_to_vmem [thread:$0]  %s11, 1024, %s466, [#allocation9], 64, 64, 4
        $region56: #{tpu_custom_call.1} parent=11 // pred_fallthru
          _
        // Predicated region
        $region57: #{tpu_custom_call.1} parent=11 // pred_check
          %p472 = pneg %p306
        $region58: #{tpu_custom_call.1} parent=11 // pred_check_branch
          %474 = sbr.rel (%p472) target = $region60
        $region59: #{tpu_custom_call.1} parent=11 // pred_region
          _
        $region60: #{tpu_custom_call.1} parent=11 // pred_fallthru
          _
        // Predicated region
        $region61: #{tpu_custom_call.1} parent=11 // pred_check
          %p475 = pneg %p327
        $region62: #{tpu_custom_call.1} parent=11 // pred_check_branch
          %477 = sbr.rel (%p475) target = $region64
        $region63: #{tpu_custom_call.1} parent=11 // pred_region
          %s479 = ssub.s32 1024, 1024
          %480 = vsyncadd [#allocation12], %s479
          %s481 = sshll.u32 [#allocation11], 4
          %s482 = int_to_ptr.vmem [resolvable:$true] %s481
          %487 = dma.hbm_to_vmem [thread:$0]  %s13, 1024, %s482, [#allocation12], 64, 64, 4
        $region64: #{tpu_custom_call.1} parent=11 // pred_fallthru
          _
        // Predicated region
        $region65: #{tpu_custom_call.1} parent=11 // pred_check
          %p488 = pneg %p348
        $region66: #{tpu_custom_call.1} parent=11 // pred_check_branch
          %490 = sbr.rel (%p488) target = $region68
        $region67: #{tpu_custom_call.1} parent=11 // pred_region
          _
        $region68: #{tpu_custom_call.1} parent=11 // pred_fallthru
          _
      $region12: #{tpu_custom_call.1} parent=5 // pred_fallthru
        _
      %p491 = scmp.lt.s32.totalorder %s28, 2
      // Predicated region
      $region69: #{tpu_custom_call.1} parent=5 // pred_check
        %p492 = pneg %p491
      $region70: #{tpu_custom_call.1} parent=5 // pred_check_branch
        %494 = sbr.rel (%p492) target = $region72
      $region71: #{tpu_custom_call.1} parent=5 // pred_region
        // Predicated region
        $region73: #{tpu_custom_call.1} parent=71 // pred_check
          %p495 = pneg %p48
        $region74: #{tpu_custom_call.1} parent=71 // pred_check_branch
          %497 = sbr.rel (%p495) target = $region76
        $region75: #{tpu_custom_call.1} parent=71 // pred_region
          %s498 = smul.u32 8, %s28
          %p499 = scmp.lt.s32.totalorder %s498, 15
          %s500 = scalar_select %p499, %s498, 15
          %s501 = smul.addr %s500, 4
          %s502 = scalar_lea.vmem %s0, %s501
          %s503 = smul.u32 8, %s28
        $region76: #{tpu_custom_call.1} parent=71 // pred_fallthru
          _
      $region72: #{tpu_custom_call.1} parent=5 // pred_fallthru
        _
      %p504 = scmp.le.s32.totalorder 1, %s28
      %p505 = scmp.lt.s32.totalorder %s28, 3
      %p506 = pnand %p504, %p505
      %p507 = pneg %p506
      // Predicated region
      $region77: #{tpu_custom_call.1} parent=5 // pred_check
        _
      $region78: #{tpu_custom_call.1} parent=5 // pred_check_branch
        %509 = sbr.rel (%p506) target = $region80
      $region79: #{tpu_custom_call.1} parent=5 // pred_region
        %s510 = ssub.s32 %s28, 1
        // Predicated region
        $region81: #{tpu_custom_call.1} parent=79 // pred_check
          %p511 = pneg %p96
        $region82: #{tpu_custom_call.1} parent=79 // pred_check_branch
          %513 = sbr.rel (%p511) target = $region84
        $region83: #{tpu_custom_call.1} parent=79 // pred_region
          %514 = dma.done [#allocation3], 128
        $region84: #{tpu_custom_call.1} parent=79 // pred_fallthru
          _
        // Predicated region
        $region85: #{tpu_custom_call.1} parent=79 // pred_check
          %p515 = pneg %p180
        $region86: #{tpu_custom_call.1} parent=79 // pred_check_branch
          %517 = sbr.rel (%p515) target = $region88
        $region87: #{tpu_custom_call.1} parent=79 // pred_region
          %518 = dma.done [#allocation6], 1024
        $region88: #{tpu_custom_call.1} parent=79 // pred_fallthru
          _
        // Predicated region
        $region89: #{tpu_custom_call.1} parent=79 // pred_check
          %p519 = pneg %p222
        $region90: #{tpu_custom_call.1} parent=79 // pred_check_branch
          %521 = sbr.rel (%p519) target = $region92
        $region91: #{tpu_custom_call.1} parent=79 // pred_region
          %522 = dma.done [#allocation6], 1024
        $region92: #{tpu_custom_call.1} parent=79 // pred_fallthru
          _
        // Predicated region
        $region93: #{tpu_custom_call.1} parent=79 // pred_check
          %p523 = pneg %p243
        $region94: #{tpu_custom_call.1} parent=79 // pred_check_branch
          %525 = sbr.rel (%p523) target = $region96
        $region95: #{tpu_custom_call.1} parent=79 // pred_region
          %526 = dma.done [#allocation9], 1024
        $region96: #{tpu_custom_call.1} parent=79 // pred_fallthru
          _
        // Predicated region
        $region97: #{tpu_custom_call.1} parent=79 // pred_check
          %p527 = pneg %p285
        $region98: #{tpu_custom_call.1} parent=79 // pred_check_branch
          %529 = sbr.rel (%p527) target = $region100
        $region99: #{tpu_custom_call.1} parent=79 // pred_region
          %530 = dma.done [#allocation9], 1024
        $region100: #{tpu_custom_call.1} parent=79 // pred_fallthru
          _
        // Predicated region
        $region101: #{tpu_custom_call.1} parent=79 // pred_check
          %p531 = pneg %p327
        $region102: #{tpu_custom_call.1} parent=79 // pred_check_branch
          %533 = sbr.rel (%p531) target = $region104
        $region103: #{tpu_custom_call.1} parent=79 // pred_region
          %534 = dma.done [#allocation12], 1024
        $region104: #{tpu_custom_call.1} parent=79 // pred_fallthru
          _
        %s535 = smul.u32 8, %s33
        %p536 = scmp.lt.s32.totalorder %s535, 15
        %s537 = scalar_select %p536, %s535, 15
        %s538 = smul.addr %s537, 4
        %s539 = scalar_lea.vmem %s0, %s538
        %p540 = pneg %p54
        %p541 = pneg %p51
        %p542 = pneg %p75
        %p543 = pneg %p72
        %p544 = pneg %p96
        %p545 = pneg %p93
        %p546 = pneg %p117
        %p547 = pneg %p114
        %p548 = pneg %p138
        %p549 = pneg %p135
        %p550 = pneg %p159
        %p551 = pneg %p156
        %p552 = pneg %p180
        %p553 = pneg %p177
        %p554 = pneg %p201
        %p555 = pneg %p198
        %p556 = pneg %p222
        %p557 = pneg %p219
        %p558 = pneg %p243
        %p559 = pneg %p240
        %p560 = pneg %p264
        %p561 = pneg %p261
        %p562 = pneg %p285
        %p563 = pneg %p282
        %p564 = pneg %p306
        %p565 = pneg %p303
        %p566 = pneg %p327
        %p567 = pneg %p324
        %p568 = pneg %p348
        %p569 = pneg %p345
        %p570 = pneg %p374
        %p571 = pneg %p371
        %s572 = sand.u32 %s361, 1
        %s573 = scalar_lea.sflag [#allocation4], %s572
        %s574 = sand.u32 %s361, 1
        %s575 = smul.addr %s574, 8
        %s576 = scalar_lea.vmem [#allocation13], %s575
        %s577 = smul.u32 8, %s33
        %p578 = scmp.lt.s32.totalorder %s577, 15
        %s579 = scalar_select %p578, %s577, 15
        %s580 = smul.addr %s579, 4
        %s581 = scalar_lea.vmem %s0, %s580
        %s582 = smul.u32 8, %s33
        %v584 = vld [vmem:[%s581] sm:$0xf]
        %v585 = vld [vmem:[%s581 + $0x4] sm:$0xf]
        %v586 = vld [vmem:[%s581 + $0x8] sm:$0xf]
        %v587 = vld [vmem:[%s581 + $0xc] sm:$0xf]
        %v588 = vld [vmem:[%s581 + $0x10] sm:$0xf]
        %v589 = vld [vmem:[%s581 + $0x14] sm:$0xf]
        %v590 = vld [vmem:[%s581 + $0x18] sm:$0xf]
        %v591 = vld [vmem:[%s581 + $0x1c] sm:$0xf]
        %v592 = vld [vmem:[#allocation2] sm:$0xf]
        %v593 = vld [vmem:[#allocation2 + $0x4] sm:$0xf]
        %v594 = vld [vmem:[%s3] sm:$0x1]
        %v596 = vlaneseq
        %v597 = vshrl.u32 %v596, 7
        %v598 = vsub.s32 0, %v597
        %v599 = vrot.slane %v594, %v598
        %v609 = vunpack.c.l.b16 %v584
        %v610 = vunpack.c.l.b16 %v585
        %v611 = vunpack.c.l.b16 %v586
        %v612 = vunpack.c.l.b16 %v587
        %v613 = vunpack.c.l.b16 %v588
        %v614 = vunpack.c.l.b16 %v589
        %v615 = vunpack.c.l.b16 %v590
        %v616 = vunpack.c.l.b16 %v591
        %v617 = vpack.c.b16 %v610, %v609
        %v618 = vpack.c.b16 %v612, %v611
        %v619 = vpack.c.b16 %v614, %v613
        %v620 = vpack.c.b16 %v616, %v615
        %v623 = vunpack.c.l.b16 %v592
        %v624 = vunpack.c.l.b16 %v593
        %v625 = vpack.c.b16 %v624, %v623
        %vm627 = vcmask 130048
        %v629 = vsel %vm627, %v617, 0
        %v632 = vsel %vm627, %v618, 0
        %v635 = vsel %vm627, %v619, 0
        %v638 = vsel %vm627, %v620, 0
        %640 = vmatprep.subr.bf16.mxu0 0
        %641 = vmatpush1.bf16.msra.mxu0 0
        %642 = vmatprep.subr.bf16.mxu0 0
        %643 = vmatpush1.bf16.msra.mxu0 0
        %644 = vmatprep.subr.bf16.mxu0 0
        %645 = vmatpush1.bf16.msra.mxu0 0
        %646 = vmatprep.subr.bf16.mxu0 0
        %647 = vmatpush1.bf16.msra.mxu0 0
        %648 = vmatprep.subr.bf16.mxu0 0
        %649 = vmatpush1.bf16.msra.mxu0 0
        %650 = vmatprep.subr.bf16.mxu0 0
        %651 = vmatpush1.bf16.msra.mxu0 0
        %652 = vmatprep.subr.bf16.mxu0 0
        %653 = vmatpush1.bf16.msra.mxu0 0
        %654 = vmatprep.subr.bf16.mxu0 0
        %655 = vmatpush1.bf16.msra.mxu0 %v625
        %656 = vmatprep.subr.bf16.mxu0 0
        %657 = vmatpush2.bf16.msra.mxu0 0
        %658 = vmatprep.subr.bf16.mxu0 0
        %659 = vmatpush2.bf16.msra.mxu0 0
        %660 = vmatprep.subr.bf16.mxu0 0
        %661 = vmatpush2.bf16.msra.mxu0 0
        %662 = vmatprep.subr.bf16.mxu0 0
        %663 = vmatpush2.bf16.msra.mxu0 0
        %664 = vmatprep.subr.bf16.mxu0 0
        %665 = vmatpush2.bf16.msra.mxu0 0
        %666 = vmatprep.subr.bf16.mxu0 0
        %667 = vmatpush2.bf16.msra.mxu0 0
        %668 = vmatprep.subr.bf16.mxu0 0
        %669 = vmatpush2.bf16.msra.mxu0 0
        %670 = vmatprep.subr.bf16.mxu0 0
        %671 = vmatpush2.bf16.msra.mxu0 0
        %672 = vmatprep.mubr.bf16.mxu0 0
        %673 = vmatmul.mubr.bf16.gmra.mxu0 %v629
        %v674 = vpop.f32.mrf.mxu0
        %v675 = vadd.f32 %v599, %v674
        %v676 = vpop.f32.mrf.mxu0
        %v677 = vpop.f32.mrf.mxu0
        %v678 = vadd.f32 %v599, %v677
        %v679 = vpop.f32.mrf.mxu0
        %680 = vmatprep.mubr.bf16.mxu0 0
        %681 = vmatmul.mubr.bf16.gmra.mxu0 %v632
        %v682 = vpop.f32.mrf.mxu0
        %v683 = vadd.f32 %v599, %v682
        %v684 = vpop.f32.mrf.mxu0
        %v685 = vpop.f32.mrf.mxu0
        %v686 = vadd.f32 %v599, %v685
        %v687 = vpop.f32.mrf.mxu0
        %688 = vmatprep.mubr.bf16.mxu0 0
        %689 = vmatmul.mubr.bf16.gmra.mxu0 %v635
        %v690 = vpop.f32.mrf.mxu0
        %v691 = vadd.f32 %v599, %v690
        %v692 = vpop.f32.mrf.mxu0
        %v693 = vpop.f32.mrf.mxu0
        %v694 = vadd.f32 %v599, %v693
        %v695 = vpop.f32.mrf.mxu0
        %696 = vmatprep.mubr.bf16.mxu0 0
        %697 = vmatmul.mubr.bf16.gmra.mxu0 %v638
        %v698 = vpop.f32.mrf.mxu0
        %v699 = vadd.f32 %v599, %v698
        %v700 = vpop.f32.mrf.mxu0
        %v701 = vpop.f32.mrf.mxu0
        %v702 = vadd.f32 %v599, %v701
        %v703 = vpop.f32.mrf.mxu0
        %704 = vdwg.mxu0
        %vm705 = vcmp.ge.f32.partialorder %v675, 0.0
        %vm706 = vcmp.ge.f32.partialorder %v678, 0.0
        %vm707 = vcmp.ge.f32.partialorder %v683, 0.0
        %vm708 = vcmp.ge.f32.partialorder %v686, 0.0
        %vm709 = vcmp.ge.f32.partialorder %v691, 0.0
        %vm710 = vcmp.ge.f32.partialorder %v694, 0.0
        %vm711 = vcmp.ge.f32.partialorder %v699, 0.0
        %vm712 = vcmp.ge.f32.partialorder %v702, 0.0
        %v713 = vmul.f32 %v675, 0.01
        %v714 = vmul.f32 %v678, 0.01
        %v715 = vmul.f32 %v683, 0.01
        %v716 = vmul.f32 %v686, 0.01
        %v717 = vmul.f32 %v691, 0.01
        %v718 = vmul.f32 %v694, 0.01
        %v719 = vmul.f32 %v699, 0.01
        %v720 = vmul.f32 %v702, 0.01
        %v721 = vsel %vm705, %v675, %v713
        %v722 = vsel %vm706, %v678, %v714
        %v723 = vsel %vm707, %v683, %v715
        %v724 = vsel %vm708, %v686, %v716
        %v725 = vsel %vm709, %v691, %v717
        %v726 = vsel %vm710, %v694, %v718
        %v727 = vsel %vm711, %v699, %v719
        %v728 = vsel %vm712, %v702, %v720
        %v729 = vpack.c.bf16 %v722, %v721
        %v730 = vpack.c.bf16 %v724, %v723
        %v731 = vpack.c.bf16 %v726, %v725
        %v732 = vpack.c.bf16 %v728, %v727
        %v733 = vld [vmem:[%s4] sm:$0xf]
        %v734 = vld [vmem:[%s4 + $0x4] sm:$0xf]
        %v735 = vld [vmem:[%s4 + $0x8] sm:$0xf]
        %v736 = vld [vmem:[%s4 + $0xc] sm:$0xf]
        %v737 = vld [vmem:[%s4 + $0x10] sm:$0xf]
        %v738 = vld [vmem:[%s4 + $0x14] sm:$0xf]
        %v739 = vld [vmem:[%s4 + $0x18] sm:$0xf]
        %v740 = vld [vmem:[%s4 + $0x1c] sm:$0xf]
        %v741 = vld [vmem:[%s4 + $0x20] sm:$0xf]
        %v742 = vld [vmem:[%s4 + $0x24] sm:$0xf]
        %v743 = vld [vmem:[%s4 + $0x28] sm:$0xf]
        %v744 = vld [vmem:[%s4 + $0x2c] sm:$0xf]
        %v745 = vld [vmem:[%s4 + $0x30] sm:$0xf]
        %v746 = vld [vmem:[%s4 + $0x34] sm:$0xf]
        %v747 = vld [vmem:[%s4 + $0x38] sm:$0xf]
        %v748 = vld [vmem:[%s4 + $0x3c] sm:$0xf]
        %v749 = vld [vmem:[%s5] sm:$0x1]
        %v751 = vlaneseq
        %v752 = vshrl.u32 %v751, 7
        %v753 = vsub.s32 0, %v752
        %v754 = vrot.slane %v749, %v753
        %v772 = vunpack.c.l.b16 %v733
        %v773 = vunpack.c.l.b16 %v734
        %v774 = vunpack.c.l.b16 %v735
        %v775 = vunpack.c.l.b16 %v736
        %v776 = vunpack.c.l.b16 %v737
        %v777 = vunpack.c.l.b16 %v738
        %v778 = vunpack.c.l.b16 %v739
        %v779 = vunpack.c.l.b16 %v740
        %v780 = vunpack.c.l.b16 %v741
        %v781 = vunpack.c.l.b16 %v742
        %v782 = vunpack.c.l.b16 %v743
        %v783 = vunpack.c.l.b16 %v744
        %v784 = vunpack.c.l.b16 %v745
        %v785 = vunpack.c.l.b16 %v746
        %v786 = vunpack.c.l.b16 %v747
        %v787 = vunpack.c.l.b16 %v748
        %v788 = vpack.c.b16 %v773, %v772
        %v789 = vpack.c.b16 %v775, %v774
        %v790 = vpack.c.b16 %v777, %v776
        %v791 = vpack.c.b16 %v779, %v778
        %v792 = vpack.c.b16 %v781, %v780
        %v793 = vpack.c.b16 %v783, %v782
        %v794 = vpack.c.b16 %v785, %v784
        %v795 = vpack.c.b16 %v787, %v786
        %804 = vmatprep.subr.bf16.mxu0 0
        %805 = vmatpush1.bf16.msra.mxu0 %v795
        %806 = vmatprep.subr.bf16.mxu0 0
        %807 = vmatpush1.bf16.msra.mxu0 %v794
        %808 = vmatprep.subr.bf16.mxu0 0
        %809 = vmatpush1.bf16.msra.mxu0 %v793
        %810 = vmatprep.subr.bf16.mxu0 0
        %811 = vmatpush1.bf16.msra.mxu0 %v792
        %812 = vmatprep.subr.bf16.mxu0 0
        %813 = vmatpush1.bf16.msra.mxu0 %v791
        %814 = vmatprep.subr.bf16.mxu0 0
        %815 = vmatpush1.bf16.msra.mxu0 %v790
        %816 = vmatprep.subr.bf16.mxu0 0
        %817 = vmatpush1.bf16.msra.mxu0 %v789
        %818 = vmatprep.subr.bf16.mxu0 0
        %819 = vmatpush1.bf16.msra.mxu0 %v788
        %820 = vmatprep.subr.bf16.mxu0 0
        %821 = vmatpush2.bf16.msra.mxu0 0
        %822 = vmatprep.subr.bf16.mxu0 0
        %823 = vmatpush2.bf16.msra.mxu0 0
        %824 = vmatprep.subr.bf16.mxu0 0
        %825 = vmatpush2.bf16.msra.mxu0 0
        %826 = vmatprep.subr.bf16.mxu0 0
        %827 = vmatpush2.bf16.msra.mxu0 0
        %828 = vmatprep.subr.bf16.mxu0 0
        %829 = vmatpush2.bf16.msra.mxu0 0
        %830 = vmatprep.subr.bf16.mxu0 0
        %831 = vmatpush2.bf16.msra.mxu0 0
        %832 = vmatprep.subr.bf16.mxu0 0
        %833 = vmatpush2.bf16.msra.mxu0 0
        %834 = vmatprep.subr.bf16.mxu0 0
        %835 = vmatpush2.bf16.msra.mxu0 0
        %836 = vmatprep.mubr.bf16.mxu0 0
        %837 = vmatmul.mubr.bf16.gmra.mxu0 %v729
        %v838 = vpop.f32.mrf.mxu0
        %v839 = vadd.f32 %v754, %v838
        %v840 = vpop.f32.mrf.mxu0
        %v841 = vpop.f32.mrf.mxu0
        %v842 = vadd.f32 %v754, %v841
        %v843 = vpop.f32.mrf.mxu0
        %844 = vmatprep.mubr.bf16.mxu0 0
        %845 = vmatmul.mubr.bf16.gmra.mxu0 %v730
        %v846 = vpop.f32.mrf.mxu0
        %v847 = vadd.f32 %v754, %v846
        %v848 = vpop.f32.mrf.mxu0
        %v849 = vpop.f32.mrf.mxu0
        %v850 = vadd.f32 %v754, %v849
        %v851 = vpop.f32.mrf.mxu0
        %852 = vmatprep.mubr.bf16.mxu0 0
        %853 = vmatmul.mubr.bf16.gmra.mxu0 %v731
        %v854 = vpop.f32.mrf.mxu0
        %v855 = vadd.f32 %v754, %v854
        %v856 = vpop.f32.mrf.mxu0
        %v857 = vpop.f32.mrf.mxu0
        %v858 = vadd.f32 %v754, %v857
        %v859 = vpop.f32.mrf.mxu0
        %860 = vmatprep.mubr.bf16.mxu0 0
        %861 = vmatmul.mubr.bf16.gmra.mxu0 %v732
        %v862 = vpop.f32.mrf.mxu0
        %v863 = vadd.f32 %v754, %v862
        %v864 = vpop.f32.mrf.mxu0
        %v865 = vpop.f32.mrf.mxu0
        %v866 = vadd.f32 %v754, %v865
        %v867 = vpop.f32.mrf.mxu0
        %868 = vdwg.mxu0
        %vm869 = vcmp.ge.f32.partialorder %v839, 0.0
        %vm870 = vcmp.ge.f32.partialorder %v842, 0.0
        %vm871 = vcmp.ge.f32.partialorder %v847, 0.0
        %vm872 = vcmp.ge.f32.partialorder %v850, 0.0
        %vm873 = vcmp.ge.f32.partialorder %v855, 0.0
        %vm874 = vcmp.ge.f32.partialorder %v858, 0.0
        %vm875 = vcmp.ge.f32.partialorder %v863, 0.0
        %vm876 = vcmp.ge.f32.partialorder %v866, 0.0
        %v877 = vmul.f32 %v839, 0.01
        %v878 = vmul.f32 %v842, 0.01
        %v879 = vmul.f32 %v847, 0.01
        %v880 = vmul.f32 %v850, 0.01
        %v881 = vmul.f32 %v855, 0.01
        %v882 = vmul.f32 %v858, 0.01
        %v883 = vmul.f32 %v863, 0.01
        %v884 = vmul.f32 %v866, 0.01
        %v885 = vsel %vm869, %v839, %v877
        %v886 = vsel %vm870, %v842, %v878
        %v887 = vsel %vm871, %v847, %v879
        %v888 = vsel %vm872, %v850, %v880
        %v889 = vsel %vm873, %v855, %v881
        %v890 = vsel %vm874, %v858, %v882
        %v891 = vsel %vm875, %v863, %v883
        %v892 = vsel %vm876, %v866, %v884
        %v893 = vadd.f32 %v885, %v721
        %v894 = vadd.f32 %v886, %v722
        %v895 = vadd.f32 %v887, %v723
        %v896 = vadd.f32 %v888, %v724
        %v897 = vadd.f32 %v889, %v725
        %v898 = vadd.f32 %v890, %v726
        %v899 = vadd.f32 %v891, %v727
        %v900 = vadd.f32 %v892, %v728
        %v901 = vpack.c.bf16 %v894, %v893
        %v902 = vpack.c.bf16 %v896, %v895
        %v903 = vpack.c.bf16 %v898, %v897
        %v904 = vpack.c.bf16 %v900, %v899
        %v905 = vld [vmem:[#allocation5] sm:$0xf]
        %v906 = vld [vmem:[#allocation5 + $0x4] sm:$0xf]
        %v907 = vld [vmem:[#allocation5 + $0x8] sm:$0xf]
        %v908 = vld [vmem:[#allocation5 + $0xc] sm:$0xf]
        %v909 = vld [vmem:[#allocation5 + $0x10] sm:$0xf]
        %v910 = vld [vmem:[#allocation5 + $0x14] sm:$0xf]
        %v911 = vld [vmem:[#allocation5 + $0x18] sm:$0xf]
        %v912 = vld [vmem:[#allocation5 + $0x1c] sm:$0xf]
        %v913 = vld [vmem:[#allocation5 + $0x20] sm:$0xf]
        %v914 = vld [vmem:[#allocation5 + $0x24] sm:$0xf]
        %v915 = vld [vmem:[#allocation5 + $0x28] sm:$0xf]
        %v916 = vld [vmem:[#allocation5 + $0x2c] sm:$0xf]
        %v917 = vld [vmem:[#allocation5 + $0x30] sm:$0xf]
        %v918 = vld [vmem:[#allocation5 + $0x34] sm:$0xf]
        %v919 = vld [vmem:[#allocation5 + $0x38] sm:$0xf]
        %v920 = vld [vmem:[#allocation5 + $0x3c] sm:$0xf]
        %v921 = vld [vmem:[%s7] sm:$0x1]
        %v923 = vlaneseq
        %v924 = vshrl.u32 %v923, 7
        %v925 = vsub.s32 0, %v924
        %v926 = vrot.slane %v921, %v925
        %v944 = vunpack.c.l.b16 %v905
        %v945 = vunpack.c.l.b16 %v906
        %v946 = vunpack.c.l.b16 %v907
        %v947 = vunpack.c.l.b16 %v908
        %v948 = vunpack.c.l.b16 %v909
        %v949 = vunpack.c.l.b16 %v910
        %v950 = vunpack.c.l.b16 %v911
        %v951 = vunpack.c.l.b16 %v912
        %v952 = vunpack.c.l.b16 %v913
        %v953 = vunpack.c.l.b16 %v914
        %v954 = vunpack.c.l.b16 %v915
        %v955 = vunpack.c.l.b16 %v916
        %v956 = vunpack.c.l.b16 %v917
        %v957 = vunpack.c.l.b16 %v918
        %v958 = vunpack.c.l.b16 %v919
        %v959 = vunpack.c.l.b16 %v920
        %v960 = vpack.c.b16 %v945, %v944
        %v961 = vpack.c.b16 %v947, %v946
        %v962 = vpack.c.b16 %v949, %v948
        %v963 = vpack.c.b16 %v951, %v950
        %v964 = vpack.c.b16 %v953, %v952
        %v965 = vpack.c.b16 %v955, %v954
        %v966 = vpack.c.b16 %v957, %v956
        %v967 = vpack.c.b16 %v959, %v958
        %976 = vmatprep.subr.bf16.mxu0 0
        %977 = vmatpush1.bf16.msra.mxu0 %v967
        %978 = vmatprep.subr.bf16.mxu0 0
        %979 = vmatpush1.bf16.msra.mxu0 %v966
        %980 = vmatprep.subr.bf16.mxu0 0
        %981 = vmatpush1.bf16.msra.mxu0 %v965
        %982 = vmatprep.subr.bf16.mxu0 0
        %983 = vmatpush1.bf16.msra.mxu0 %v964
        %984 = vmatprep.subr.bf16.mxu0 0
        %985 = vmatpush1.bf16.msra.mxu0 %v963
        %986 = vmatprep.subr.bf16.mxu0 0
        %987 = vmatpush1.bf16.msra.mxu0 %v962
        %988 = vmatprep.subr.bf16.mxu0 0
        %989 = vmatpush1.bf16.msra.mxu0 %v961
        %990 = vmatprep.subr.bf16.mxu0 0
        %991 = vmatpush1.bf16.msra.mxu0 %v960
        %992 = vmatprep.subr.bf16.mxu0 0
        %993 = vmatpush2.bf16.msra.mxu0 0
        %994 = vmatprep.subr.bf16.mxu0 0
        %995 = vmatpush2.bf16.msra.mxu0 0
        %996 = vmatprep.subr.bf16.mxu0 0
        %997 = vmatpush2.bf16.msra.mxu0 0
        %998 = vmatprep.subr.bf16.mxu0 0
        %999 = vmatpush2.bf16.msra.mxu0 0
        %1000 = vmatprep.subr.bf16.mxu0 0
        %1001 = vmatpush2.bf16.msra.mxu0 0
        %1002 = vmatprep.subr.bf16.mxu0 0
        %1003 = vmatpush2.bf16.msra.mxu0 0
        %1004 = vmatprep.subr.bf16.mxu0 0
        %1005 = vmatpush2.bf16.msra.mxu0 0
        %1006 = vmatprep.subr.bf16.mxu0 0
        %1007 = vmatpush2.bf16.msra.mxu0 0
        %1008 = vmatprep.mubr.bf16.mxu0 0
        %1009 = vmatmul.mubr.bf16.gmra.mxu0 %v901
        %v1010 = vpop.f32.mrf.mxu0
        %v1011 = vadd.f32 %v926, %v1010
        %v1012 = vpop.f32.mrf.mxu0
        %v1013 = vpop.f32.mrf.mxu0
        %v1014 = vadd.f32 %v926, %v1013
        %v1015 = vpop.f32.mrf.mxu0
        %1016 = vmatprep.mubr.bf16.mxu0 0
        %1017 = vmatmul.mubr.bf16.gmra.mxu0 %v902
        %v1018 = vpop.f32.mrf.mxu0
        %v1019 = vadd.f32 %v926, %v1018
        %v1020 = vpop.f32.mrf.mxu0
        %v1021 = vpop.f32.mrf.mxu0
        %v1022 = vadd.f32 %v926, %v1021
        %v1023 = vpop.f32.mrf.mxu0
        %1024 = vmatprep.mubr.bf16.mxu0 0
        %1025 = vmatmul.mubr.bf16.gmra.mxu0 %v903
        %v1026 = vpop.f32.mrf.mxu0
        %v1027 = vadd.f32 %v926, %v1026
        %v1028 = vpop.f32.mrf.mxu0
        %v1029 = vpop.f32.mrf.mxu0
        %v1030 = vadd.f32 %v926, %v1029
        %v1031 = vpop.f32.mrf.mxu0
        %1032 = vmatprep.mubr.bf16.mxu0 0
        %1033 = vmatmul.mubr.bf16.gmra.mxu0 %v904
        %v1034 = vpop.f32.mrf.mxu0
        %v1035 = vadd.f32 %v926, %v1034
        %v1036 = vpop.f32.mrf.mxu0
        %v1037 = vpop.f32.mrf.mxu0
        %v1038 = vadd.f32 %v926, %v1037
        %v1039 = vpop.f32.mrf.mxu0
        %1040 = vdwg.mxu0
        %vm1041 = vcmp.ge.f32.partialorder %v1011, 0.0
        %vm1042 = vcmp.ge.f32.partialorder %v1014, 0.0
        %vm1043 = vcmp.ge.f32.partialorder %v1019, 0.0
        %vm1044 = vcmp.ge.f32.partialorder %v1022, 0.0
        %vm1045 = vcmp.ge.f32.partialorder %v1027, 0.0
        %vm1046 = vcmp.ge.f32.partialorder %v1030, 0.0
        %vm1047 = vcmp.ge.f32.partialorder %v1035, 0.0
        %vm1048 = vcmp.ge.f32.partialorder %v1038, 0.0
        %v1049 = vmul.f32 %v1011, 0.01
        %v1050 = vmul.f32 %v1014, 0.01
        %v1051 = vmul.f32 %v1019, 0.01
        %v1052 = vmul.f32 %v1022, 0.01
        %v1053 = vmul.f32 %v1027, 0.01
        %v1054 = vmul.f32 %v1030, 0.01
        %v1055 = vmul.f32 %v1035, 0.01
        %v1056 = vmul.f32 %v1038, 0.01
        %v1057 = vsel %vm1041, %v1011, %v1049
        %v1058 = vsel %vm1042, %v1014, %v1050
        %v1059 = vsel %vm1043, %v1019, %v1051
        %v1060 = vsel %vm1044, %v1022, %v1052
        %v1061 = vsel %vm1045, %v1027, %v1053
        %v1062 = vsel %vm1046, %v1030, %v1054
        %v1063 = vsel %vm1047, %v1035, %v1055
        %v1064 = vsel %vm1048, %v1038, %v1056
        %v1065 = vadd.f32 %v1057, %v893
        %v1066 = vadd.f32 %v1058, %v894
        %v1067 = vadd.f32 %v1059, %v895
        %v1068 = vadd.f32 %v1060, %v896
        %v1069 = vadd.f32 %v1061, %v897
        %v1070 = vadd.f32 %v1062, %v898
        %v1071 = vadd.f32 %v1063, %v899
        %v1072 = vadd.f32 %v1064, %v900
        %v1073 = vld [vmem:[%s1] sm:$0xf]
        %v1074 = vld [vmem:[%s1 + $0x4] sm:$0xf]
        %v1075 = vpack.c.bf16 %v1066, %v1065
        %v1076 = vpack.c.bf16 %v1068, %v1067
        %v1077 = vpack.c.bf16 %v1070, %v1069
        %v1078 = vpack.c.bf16 %v1072, %v1071
        %v1081 = vunpack.c.l.b16 %v1073
        %v1082 = vunpack.c.l.b16 %v1074
        %v1083 = vpack.c.b16 %v1082, %v1081
        %vm1084 = vcmask 523264
        %v1086 = vsel %vm1084, %v1083, 0
        %1088 = vmatprep.subr.bf16.mxu0 0
        %1089 = vmatpush1.bf16.msra.mxu0 0
        %1090 = vmatprep.subr.bf16.mxu0 0
        %1091 = vmatpush1.bf16.msra.mxu0 0
        %1092 = vmatprep.subr.bf16.mxu0 0
        %1093 = vmatpush1.bf16.msra.mxu0 0
        %1094 = vmatprep.subr.bf16.mxu0 0
        %1095 = vmatpush1.bf16.msra.mxu0 0
        %1096 = vmatprep.subr.bf16.mxu0 0
        %1097 = vmatpush1.bf16.msra.mxu0 %v1078
        %1098 = vmatprep.subr.bf16.mxu0 0
        %1099 = vmatpush1.bf16.msra.mxu0 %v1077
        %1100 = vmatprep.subr.bf16.mxu0 0
        %1101 = vmatpush1.bf16.msra.mxu0 %v1076
        %1102 = vmatprep.subr.bf16.mxu0 0
        %1103 = vmatpush1.bf16.msra.mxu0 %v1075
        %1104 = vmatprep.subr.bf16.mxu0 0
        %1105 = vmatpush2.bf16.msra.mxu0 0
        %1106 = vmatprep.subr.bf16.mxu0 0
        %1107 = vmatpush2.bf16.msra.mxu0 0
        %1108 = vmatprep.subr.bf16.mxu0 0
        %1109 = vmatpush2.bf16.msra.mxu0 0
        %1110 = vmatprep.subr.bf16.mxu0 0
        %1111 = vmatpush2.bf16.msra.mxu0 0
        %1112 = vmatprep.subr.bf16.mxu0 0
        %1113 = vmatpush2.bf16.msra.mxu0 0
        %1114 = vmatprep.subr.bf16.mxu0 0
        %1115 = vmatpush2.bf16.msra.mxu0 0
        %1116 = vmatprep.subr.bf16.mxu0 0
        %1117 = vmatpush2.bf16.msra.mxu0 0
        %1118 = vmatprep.subr.bf16.mxu0 0
        %1119 = vmatpush2.bf16.msra.mxu0 0
        %1120 = vmatprep.mubr.bf16.mxu0 0
        %1121 = vmatmul.mubr.bf16.gmra.mxu0 %v1086
        %v1122 = vpop.f32.mrf.mxu0
        %v1123 = vadd.f32 0.0, %v1122
        %v1124 = vpop.f32.mrf.mxu0
        %v1125 = vpop.f32.mrf.mxu0
        %v1126 = vadd.f32 0.0, %v1125
        %v1127 = vpop.f32.mrf.mxu0
        %1128 = vdwg.mxu0
        %v1129 = vpack.c.bf16 %v1123, %v1123
        %v1130 = vld [vmem:[#allocation7] sm:$0xf]
        %v1131 = vld [vmem:[#allocation7 + $0x4] sm:$0xf]
        %v1132 = vld [vmem:[#allocation7 + $0x8] sm:$0xf]
        %v1133 = vld [vmem:[#allocation7 + $0xc] sm:$0xf]
        %v1134 = vld [vmem:[#allocation7 + $0x10] sm:$0xf]
        %v1135 = vld [vmem:[#allocation7 + $0x14] sm:$0xf]
        %v1136 = vld [vmem:[#allocation7 + $0x18] sm:$0xf]
        %v1137 = vld [vmem:[#allocation7 + $0x1c] sm:$0xf]
        %v1138 = vld [vmem:[#allocation7 + $0x20] sm:$0xf]
        %v1139 = vld [vmem:[#allocation7 + $0x24] sm:$0xf]
        %v1140 = vld [vmem:[#allocation7 + $0x28] sm:$0xf]
        %v1141 = vld [vmem:[#allocation7 + $0x2c] sm:$0xf]
        %v1142 = vld [vmem:[#allocation7 + $0x30] sm:$0xf]
        %v1143 = vld [vmem:[#allocation7 + $0x34] sm:$0xf]
        %v1144 = vld [vmem:[#allocation7 + $0x38] sm:$0xf]
        %v1145 = vld [vmem:[#allocation7 + $0x3c] sm:$0xf]
        %v1146 = vpack.c.bf16 %v1126, %v1126
        %v1147 = vld [vmem:[#allocation8] sm:$0xf]
        %v1148 = vld [vmem:[#allocation8 + $0x4] sm:$0xf]
        %v1149 = vld [vmem:[#allocation8 + $0x8] sm:$0xf]
        %v1150 = vld [vmem:[#allocation8 + $0xc] sm:$0xf]
        %v1151 = vld [vmem:[#allocation8 + $0x10] sm:$0xf]
        %v1152 = vld [vmem:[#allocation8 + $0x14] sm:$0xf]
        %v1153 = vld [vmem:[#allocation8 + $0x18] sm:$0xf]
        %v1154 = vld [vmem:[#allocation8 + $0x1c] sm:$0xf]
        %v1155 = vld [vmem:[#allocation8 + $0x20] sm:$0xf]
        %v1156 = vld [vmem:[#allocation8 + $0x24] sm:$0xf]
        %v1157 = vld [vmem:[#allocation8 + $0x28] sm:$0xf]
        %v1158 = vld [vmem:[#allocation8 + $0x2c] sm:$0xf]
        %v1159 = vld [vmem:[#allocation8 + $0x30] sm:$0xf]
        %v1160 = vld [vmem:[#allocation8 + $0x34] sm:$0xf]
        %v1161 = vld [vmem:[#allocation8 + $0x38] sm:$0xf]
        %v1162 = vld [vmem:[#allocation8 + $0x3c] sm:$0xf]
        %v1179 = vunpack.c.l.b16 %v1147
        %v1180 = vunpack.c.l.b16 %v1148
        %v1181 = vunpack.c.l.b16 %v1149
        %v1182 = vunpack.c.l.b16 %v1150
        %v1183 = vunpack.c.l.b16 %v1151
        %v1184 = vunpack.c.l.b16 %v1152
        %v1185 = vunpack.c.l.b16 %v1153
        %v1186 = vunpack.c.l.b16 %v1154
        %v1187 = vunpack.c.l.b16 %v1155
        %v1188 = vunpack.c.l.b16 %v1156
        %v1189 = vunpack.c.l.b16 %v1157
        %v1190 = vunpack.c.l.b16 %v1158
        %v1191 = vunpack.c.l.b16 %v1159
        %v1192 = vunpack.c.l.b16 %v1160
        %v1193 = vunpack.c.l.b16 %v1161
        %v1194 = vunpack.c.l.b16 %v1162
        %v1195 = vpack.c.b16 %v1180, %v1179
        %v1196 = vpack.c.b16 %v1182, %v1181
        %v1197 = vpack.c.b16 %v1184, %v1183
        %v1198 = vpack.c.b16 %v1186, %v1185
        %v1199 = vpack.c.b16 %v1188, %v1187
        %v1200 = vpack.c.b16 %v1190, %v1189
        %v1201 = vpack.c.b16 %v1192, %v1191
        %v1202 = vpack.c.b16 %v1194, %v1193
        %1211 = vmatprep.subr.bf16.mxu0 0
        %1212 = vmatpush1.bf16.msra.mxu0 %v1202
        %1213 = vmatprep.subr.bf16.mxu0 0
        %1214 = vmatpush1.bf16.msra.mxu0 %v1201
        %1215 = vmatprep.subr.bf16.mxu0 0
        %1216 = vmatpush1.bf16.msra.mxu0 %v1200
        %1217 = vmatprep.subr.bf16.mxu0 0
        %1218 = vmatpush1.bf16.msra.mxu0 %v1199
        %1219 = vmatprep.subr.bf16.mxu0 0
        %1220 = vmatpush1.bf16.msra.mxu0 %v1198
        %1221 = vmatprep.subr.bf16.mxu0 0
        %1222 = vmatpush1.bf16.msra.mxu0 %v1197
        %1223 = vmatprep.subr.bf16.mxu0 0
        %1224 = vmatpush1.bf16.msra.mxu0 %v1196
        %1225 = vmatprep.subr.bf16.mxu0 0
        %1226 = vmatpush1.bf16.msra.mxu0 %v1195
        %1227 = vmatprep.subr.bf16.mxu0 0
        %1228 = vmatpush2.bf16.msra.mxu0 0
        %1229 = vmatprep.subr.bf16.mxu0 0
        %1230 = vmatpush2.bf16.msra.mxu0 0
        %1231 = vmatprep.subr.bf16.mxu0 0
        %1232 = vmatpush2.bf16.msra.mxu0 0
        %1233 = vmatprep.subr.bf16.mxu0 0
        %1234 = vmatpush2.bf16.msra.mxu0 0
        %1235 = vmatprep.subr.bf16.mxu0 0
        %1236 = vmatpush2.bf16.msra.mxu0 0
        %1237 = vmatprep.subr.bf16.mxu0 0
        %1238 = vmatpush2.bf16.msra.mxu0 0
        %1239 = vmatprep.subr.bf16.mxu0 0
        %1240 = vmatpush2.bf16.msra.mxu0 0
        %1241 = vmatprep.subr.bf16.mxu0 0
        %1242 = vmatpush2.bf16.msra.mxu0 0
        %1243 = vmatprep.mubr.bf16.mxu0 0
        %1244 = vmatmul.mubr.bf16.gmra.mxu0 %v1146
        %v1245 = vpop.f32.mrf.mxu0
        %v1246 = vadd.f32 0.0, %v1245
        %v1247 = vpop.f32.mrf.mxu0
        %v1248 = vpop.f32.mrf.mxu0
        %v1249 = vpop.f32.mrf.mxu0
        %1250 = vdwg.mxu0
        %v1267 = vunpack.c.l.b16 %v1130
        %v1268 = vunpack.c.l.b16 %v1131
        %v1269 = vunpack.c.l.b16 %v1132
        %v1270 = vunpack.c.l.b16 %v1133
        %v1271 = vunpack.c.l.b16 %v1134
        %v1272 = vunpack.c.l.b16 %v1135
        %v1273 = vunpack.c.l.b16 %v1136
        %v1274 = vunpack.c.l.b16 %v1137
        %v1275 = vunpack.c.l.b16 %v1138
        %v1276 = vunpack.c.l.b16 %v1139
        %v1277 = vunpack.c.l.b16 %v1140
        %v1278 = vunpack.c.l.b16 %v1141
        %v1279 = vunpack.c.l.b16 %v1142
        %v1280 = vunpack.c.l.b16 %v1143
        %v1281 = vunpack.c.l.b16 %v1144
        %v1282 = vunpack.c.l.b16 %v1145
        %v1283 = vpack.c.b16 %v1268, %v1267
        %v1284 = vpack.c.b16 %v1270, %v1269
        %v1285 = vpack.c.b16 %v1272, %v1271
        %v1286 = vpack.c.b16 %v1274, %v1273
        %v1287 = vpack.c.b16 %v1276, %v1275
        %v1288 = vpack.c.b16 %v1278, %v1277
        %v1289 = vpack.c.b16 %v1280, %v1279
        %v1290 = vpack.c.b16 %v1282, %v1281
        %1299 = vmatprep.subr.bf16.mxu0 0
        %1300 = vmatpush1.bf16.msra.mxu0 %v1290
        %1301 = vmatprep.subr.bf16.mxu0 0
        %1302 = vmatpush1.bf16.msra.mxu0 %v1289
        %1303 = vmatprep.subr.bf16.mxu0 0
        %1304 = vmatpush1.bf16.msra.mxu0 %v1288
        %1305 = vmatprep.subr.bf16.mxu0 0
        %1306 = vmatpush1.bf16.msra.mxu0 %v1287
        %1307 = vmatprep.subr.bf16.mxu0 0
        %1308 = vmatpush1.bf16.msra.mxu0 %v1286
        %1309 = vmatprep.subr.bf16.mxu0 0
        %1310 = vmatpush1.bf16.msra.mxu0 %v1285
        %1311 = vmatprep.subr.bf16.mxu0 0
        %1312 = vmatpush1.bf16.msra.mxu0 %v1284
        %1313 = vmatprep.subr.bf16.mxu0 0
        %1314 = vmatpush1.bf16.msra.mxu0 %v1283
        %1315 = vmatprep.subr.bf16.mxu0 0
        %1316 = vmatpush2.bf16.msra.mxu0 0
        %1317 = vmatprep.subr.bf16.mxu0 0
        %1318 = vmatpush2.bf16.msra.mxu0 0
        %1319 = vmatprep.subr.bf16.mxu0 0
        %1320 = vmatpush2.bf16.msra.mxu0 0
        %1321 = vmatprep.subr.bf16.mxu0 0
        %1322 = vmatpush2.bf16.msra.mxu0 0
        %1323 = vmatprep.subr.bf16.mxu0 0
        %1324 = vmatpush2.bf16.msra.mxu0 0
        %1325 = vmatprep.subr.bf16.mxu0 0
        %1326 = vmatpush2.bf16.msra.mxu0 0
        %1327 = vmatprep.subr.bf16.mxu0 0
        %1328 = vmatpush2.bf16.msra.mxu0 0
        %1329 = vmatprep.subr.bf16.mxu0 0
        %1330 = vmatpush2.bf16.msra.mxu0 0
        %1331 = vmatprep.mubr.bf16.mxu0 0
        %1332 = vmatmul.mubr.bf16.gmra.mxu0 %v1129
        %v1333 = vpop.f32.mrf.mxu0
        %v1334 = vadd.f32 %v1246, %v1333
        %v1335 = vpop.f32.mrf.mxu0
        %v1336 = vpop.f32.mrf.mxu0
        %v1337 = vpop.f32.mrf.mxu0
        %1338 = vdwg.mxu0
        %v1339 = vld [vmem:[%s10] sm:$0x1]
        %v1341 = vlaneseq
        %v1342 = vshrl.u32 %v1341, 7
        %v1343 = vsub.s32 0, %v1342
        %v1344 = vrot.slane %v1339, %v1343
        %v1346 = vadd.f32 %v1334, %v1344
        %vm1347 = vcmp.ge.f32.partialorder %v1346, 0.0
        %v1348 = vmul.f32 %v1346, 0.01
        %v1349 = vsel %vm1347, %v1346, %v1348
        %v1350 = vpack.c.bf16 %v1349, %v1349
        %v1351 = vld [vmem:[#allocation10] sm:$0xf]
        %v1352 = vld [vmem:[#allocation10 + $0x4] sm:$0xf]
        %v1353 = vld [vmem:[#allocation10 + $0x8] sm:$0xf]
        %v1354 = vld [vmem:[#allocation10 + $0xc] sm:$0xf]
        %v1355 = vld [vmem:[#allocation10 + $0x10] sm:$0xf]
        %v1356 = vld [vmem:[#allocation10 + $0x14] sm:$0xf]
        %v1357 = vld [vmem:[#allocation10 + $0x18] sm:$0xf]
        %v1358 = vld [vmem:[#allocation10 + $0x1c] sm:$0xf]
        %v1359 = vld [vmem:[#allocation10 + $0x20] sm:$0xf]
        %v1360 = vld [vmem:[#allocation10 + $0x24] sm:$0xf]
        %v1361 = vld [vmem:[#allocation10 + $0x28] sm:$0xf]
        %v1362 = vld [vmem:[#allocation10 + $0x2c] sm:$0xf]
        %v1363 = vld [vmem:[#allocation10 + $0x30] sm:$0xf]
        %v1364 = vld [vmem:[#allocation10 + $0x34] sm:$0xf]
        %v1365 = vld [vmem:[#allocation10 + $0x38] sm:$0xf]
        %v1366 = vld [vmem:[#allocation10 + $0x3c] sm:$0xf]
        %v1367 = vld [vmem:[%s12] sm:$0x1]
        %v1369 = vlaneseq
        %v1370 = vshrl.u32 %v1369, 7
        %v1371 = vsub.s32 0, %v1370
        %v1372 = vrot.slane %v1367, %v1371
        %v1390 = vunpack.c.l.b16 %v1351
        %v1391 = vunpack.c.l.b16 %v1352
        %v1392 = vunpack.c.l.b16 %v1353
        %v1393 = vunpack.c.l.b16 %v1354
        %v1394 = vunpack.c.l.b16 %v1355
        %v1395 = vunpack.c.l.b16 %v1356
        %v1396 = vunpack.c.l.b16 %v1357
        %v1397 = vunpack.c.l.b16 %v1358
        %v1398 = vunpack.c.l.b16 %v1359
        %v1399 = vunpack.c.l.b16 %v1360
        %v1400 = vunpack.c.l.b16 %v1361
        %v1401 = vunpack.c.l.b16 %v1362
        %v1402 = vunpack.c.l.b16 %v1363
        %v1403 = vunpack.c.l.b16 %v1364
        %v1404 = vunpack.c.l.b16 %v1365
        %v1405 = vunpack.c.l.b16 %v1366
        %v1406 = vpack.c.b16 %v1391, %v1390
        %v1407 = vpack.c.b16 %v1393, %v1392
        %v1408 = vpack.c.b16 %v1395, %v1394
        %v1409 = vpack.c.b16 %v1397, %v1396
        %v1410 = vpack.c.b16 %v1399, %v1398
        %v1411 = vpack.c.b16 %v1401, %v1400
        %v1412 = vpack.c.b16 %v1403, %v1402
        %v1413 = vpack.c.b16 %v1405, %v1404
        %1422 = vmatprep.subr.bf16.mxu0 0
        %1423 = vmatpush1.bf16.msra.mxu0 %v1413
        %1424 = vmatprep.subr.bf16.mxu0 0
        %1425 = vmatpush1.bf16.msra.mxu0 %v1412
        %1426 = vmatprep.subr.bf16.mxu0 0
        %1427 = vmatpush1.bf16.msra.mxu0 %v1411
        %1428 = vmatprep.subr.bf16.mxu0 0
        %1429 = vmatpush1.bf16.msra.mxu0 %v1410
        %1430 = vmatprep.subr.bf16.mxu0 0
        %1431 = vmatpush1.bf16.msra.mxu0 %v1409
        %1432 = vmatprep.subr.bf16.mxu0 0
        %1433 = vmatpush1.bf16.msra.mxu0 %v1408
        %1434 = vmatprep.subr.bf16.mxu0 0
        %1435 = vmatpush1.bf16.msra.mxu0 %v1407
        %1436 = vmatprep.subr.bf16.mxu0 0
        %1437 = vmatpush1.bf16.msra.mxu0 %v1406
        %1438 = vmatprep.subr.bf16.mxu0 0
        %1439 = vmatpush2.bf16.msra.mxu0 0
        %1440 = vmatprep.subr.bf16.mxu0 0
        %1441 = vmatpush2.bf16.msra.mxu0 0
        %1442 = vmatprep.subr.bf16.mxu0 0
        %1443 = vmatpush2.bf16.msra.mxu0 0
        %1444 = vmatprep.subr.bf16.mxu0 0
        %1445 = vmatpush2.bf16.msra.mxu0 0
        %1446 = vmatprep.subr.bf16.mxu0 0
        %1447 = vmatpush2.bf16.msra.mxu0 0
        %1448 = vmatprep.subr.bf16.mxu0 0
        %1449 = vmatpush2.bf16.msra.mxu0 0
        %1450 = vmatprep.subr.bf16.mxu0 0
        %1451 = vmatpush2.bf16.msra.mxu0 0
        %1452 = vmatprep.subr.bf16.mxu0 0
        %1453 = vmatpush2.bf16.msra.mxu0 0
        %1454 = vmatprep.mubr.bf16.mxu0 0
        %1455 = vmatmul.mubr.bf16.gmra.mxu0 %v1350
        %v1456 = vpop.f32.mrf.mxu0
        %v1457 = vadd.f32 %v1372, %v1456
        %v1458 = vpop.f32.mrf.mxu0
        %v1459 = vpop.f32.mrf.mxu0
        %v1460 = vpop.f32.mrf.mxu0
        %1461 = vdwg.mxu0
        %vm1462 = vcmp.ge.f32.partialorder %v1457, 0.0
        %v1463 = vmul.f32 %v1457, 0.01
        %v1464 = vsel %vm1462, %v1457, %v1463
        %v1465 = vadd.f32 %v1464, %v1349
        %v1466 = vpack.c.bf16 %v1465, %v1465
        %v1467 = vld [vmem:[#allocation11] sm:$0xf]
        %v1468 = vld [vmem:[#allocation11 + $0x4] sm:$0xf]
        %v1469 = vld [vmem:[#allocation11 + $0x8] sm:$0xf]
        %v1470 = vld [vmem:[#allocation11 + $0xc] sm:$0xf]
        %v1471 = vld [vmem:[#allocation11 + $0x10] sm:$0xf]
        %v1472 = vld [vmem:[#allocation11 + $0x14] sm:$0xf]
        %v1473 = vld [vmem:[#allocation11 + $0x18] sm:$0xf]
        %v1474 = vld [vmem:[#allocation11 + $0x1c] sm:$0xf]
        %v1475 = vld [vmem:[#allocation11 + $0x20] sm:$0xf]
        %v1476 = vld [vmem:[#allocation11 + $0x24] sm:$0xf]
        %v1477 = vld [vmem:[#allocation11 + $0x28] sm:$0xf]
        %v1478 = vld [vmem:[#allocation11 + $0x2c] sm:$0xf]
        %v1479 = vld [vmem:[#allocation11 + $0x30] sm:$0xf]
        %v1480 = vld [vmem:[#allocation11 + $0x34] sm:$0xf]
        %v1481 = vld [vmem:[#allocation11 + $0x38] sm:$0xf]
        %v1482 = vld [vmem:[#allocation11 + $0x3c] sm:$0xf]
        %v1483 = vld [vmem:[%s14] sm:$0x1]
        %v1485 = vlaneseq
        %v1486 = vshrl.u32 %v1485, 7
        %v1487 = vsub.s32 0, %v1486
        %v1488 = vrot.slane %v1483, %v1487
        %v1506 = vunpack.c.l.b16 %v1467
        %v1507 = vunpack.c.l.b16 %v1468
        %v1508 = vunpack.c.l.b16 %v1469
        %v1509 = vunpack.c.l.b16 %v1470
        %v1510 = vunpack.c.l.b16 %v1471
        %v1511 = vunpack.c.l.b16 %v1472
        %v1512 = vunpack.c.l.b16 %v1473
        %v1513 = vunpack.c.l.b16 %v1474
        %v1514 = vunpack.c.l.b16 %v1475
        %v1515 = vunpack.c.l.b16 %v1476
        %v1516 = vunpack.c.l.b16 %v1477
        %v1517 = vunpack.c.l.b16 %v1478
        %v1518 = vunpack.c.l.b16 %v1479
        %v1519 = vunpack.c.l.b16 %v1480
        %v1520 = vunpack.c.l.b16 %v1481
        %v1521 = vunpack.c.l.b16 %v1482
        %v1522 = vpack.c.b16 %v1507, %v1506
        %v1523 = vpack.c.b16 %v1509, %v1508
        %v1524 = vpack.c.b16 %v1511, %v1510
        %v1525 = vpack.c.b16 %v1513, %v1512
        %v1526 = vpack.c.b16 %v1515, %v1514
        %v1527 = vpack.c.b16 %v1517, %v1516
        %v1528 = vpack.c.b16 %v1519, %v1518
        %v1529 = vpack.c.b16 %v1521, %v1520
        %1538 = vmatprep.subr.bf16.mxu0 0
        %1539 = vmatpush1.bf16.msra.mxu0 %v1529
        %1540 = vmatprep.subr.bf16.mxu0 0
        %1541 = vmatpush1.bf16.msra.mxu0 %v1528
        %1542 = vmatprep.subr.bf16.mxu0 0
        %1543 = vmatpush1.bf16.msra.mxu0 %v1527
        %1544 = vmatprep.subr.bf16.mxu0 0
        %1545 = vmatpush1.bf16.msra.mxu0 %v1526
        %1546 = vmatprep.subr.bf16.mxu0 0
        %1547 = vmatpush1.bf16.msra.mxu0 %v1525
        %1548 = vmatprep.subr.bf16.mxu0 0
        %1549 = vmatpush1.bf16.msra.mxu0 %v1524
        %1550 = vmatprep.subr.bf16.mxu0 0
        %1551 = vmatpush1.bf16.msra.mxu0 %v1523
        %1552 = vmatprep.subr.bf16.mxu0 0
        %1553 = vmatpush1.bf16.msra.mxu0 %v1522
        %1554 = vmatprep.subr.bf16.mxu0 0
        %1555 = vmatpush2.bf16.msra.mxu0 0
        %1556 = vmatprep.subr.bf16.mxu0 0
        %1557 = vmatpush2.bf16.msra.mxu0 0
        %1558 = vmatprep.subr.bf16.mxu0 0
        %1559 = vmatpush2.bf16.msra.mxu0 0
        %1560 = vmatprep.subr.bf16.mxu0 0
        %1561 = vmatpush2.bf16.msra.mxu0 0
        %1562 = vmatprep.subr.bf16.mxu0 0
        %1563 = vmatpush2.bf16.msra.mxu0 0
        %1564 = vmatprep.subr.bf16.mxu0 0
        %1565 = vmatpush2.bf16.msra.mxu0 0
        %1566 = vmatprep.subr.bf16.mxu0 0
        %1567 = vmatpush2.bf16.msra.mxu0 0
        %1568 = vmatprep.subr.bf16.mxu0 0
        %1569 = vmatpush2.bf16.msra.mxu0 0
        %1570 = vmatprep.mubr.bf16.mxu0 0
        %1571 = vmatmul.mubr.bf16.gmra.mxu0 %v1466
        %v1572 = vpop.f32.mrf.mxu0
        %v1573 = vadd.f32 %v1488, %v1572
        %v1574 = vpop.f32.mrf.mxu0
        %v1575 = vpop.f32.mrf.mxu0
        %v1576 = vpop.f32.mrf.mxu0
        %1577 = vdwg.mxu0
        %1578 = vst [vmem:[%s576] sm:$0xff] %v1573
        %s1579 = sand.u32 %s361, 1
        %s1580 = scalar_lea.sflag [#allocation4], %s1579
        %s1581 = sand.u32 %s361, 1
        %s1582 = smul.addr %s1581, 8
        %s1583 = scalar_lea.vmem [#allocation13], %s1582
        // Predicated region
        $region105: #{tpu_custom_call.1} parent=79 // pred_check
          %p1584 = pneg %p371
        $region106: #{tpu_custom_call.1} parent=79 // pred_check_branch
          %1586 = sbr.rel (%p1584) target = $region108
        $region107: #{tpu_custom_call.1} parent=79 // pred_region
          %s1588 = ssub.s32 128, 128
          %1589 = vsyncadd %s1580, %s1588
          %s1590 = smul.addr %s33, 128
          %s1591 = scalar_lea.hbm %s15, %s1590
          %s1593 = sshll.u32 %s1583, 4
          %s1594 = int_to_ptr.vmem [resolvable:$true] %s1593
          %1596 = dma.vmem_to_hbm [thread:$0]  %s1594, 128, %s1591, %s1580
        $region108: #{tpu_custom_call.1} parent=79 // pred_fallthru
          _
      $region80: #{tpu_custom_call.1} parent=5 // pred_fallthru
        _
      %p1597 = scmp.le.s32.totalorder 2, %s28
      // Predicated region
      $region109: #{tpu_custom_call.1} parent=5 // pred_check
        %p1598 = pneg %p1597
      $region110: #{tpu_custom_call.1} parent=5 // pred_check_branch
        %1600 = sbr.rel (%p1598) target = $region112
      $region111: #{tpu_custom_call.1} parent=5 // pred_region
        %s1601 = ssub.s32 %s28, 2
        // Predicated region
        $region113: #{tpu_custom_call.1} parent=111 // pred_check
          %p1602 = pneg %p377
        $region114: #{tpu_custom_call.1} parent=111 // pred_check_branch
          %1604 = sbr.rel (%p1602) target = $region116
        $region115: #{tpu_custom_call.1} parent=111 // pred_region
          %s1605 = sand.u32 %s362, 1
          %s1606 = scalar_lea.sflag [#allocation4], %s1605
          %s1607 = sand.u32 %s362, 1
          %s1608 = smul.addr %s1607, 8
          %s1609 = scalar_lea.vmem [#allocation13], %s1608
          %1610 = dma.done %s1606, 128
        $region116: #{tpu_custom_call.1} parent=111 // pred_fallthru
          _
      $region112: #{tpu_custom_call.1} parent=5 // pred_fallthru
        _
    $region6: #{tpu_custom_call.1} parent=1 // loop_footer
      %s32 = sadd.s32 1, %s28
    $region7: #{tpu_custom_call.1} parent=1 // loop_footer_branch
      %27 = sbr.rel target = $region3
    $region8: #{tpu_custom_call.1} parent=1 // loop_exit
      _
    %1611 = vsyncpa [#allocation3], 1
    %s1612 = scalar_lea.sflag [#allocation3], 1
    %1613 = vsyncpa %s1612, 1
    %1614 = vsyncpa [#allocation6], 1
    %1615 = vsyncpa [#allocation9], 1
    %1616 = vsyncpa [#allocation12], 1
    %1617 = vsyncpa [#allocation4], 1
    %s1618 = scalar_lea.sflag [#allocation4], 1
    %1619 = vsyncpa %s1618, 1

</llo_original>
